<compile_context>
chip_gen: v6e
topology: v6e:2x2x1
jax: 0.10.0
libtpu: 0.0.40
codegen_flags: <defaults>
</compile_context>

<pallas_src>
import jax
import jax.numpy as jnp
import numpy as np
from jax.experimental import pallas as pl
from jax.experimental.pallas import tpu as pltpu


def gru_chunk_kernel(ixp_ref, whh_ref, wuu_ref, bfg_ref, hs_ref, h_scr):
    """Process one chunk of TT time steps of the CustomGRU recurrence.

    ixp_ref : (TT, Bt, 3*Hp) precomputed input projections [ia | ip1 | ip2]
                             (input-side + hidden-side biases already folded in)
    whh_ref : (Hp, 5*Hp)     hidden->hidden weights [ha | hp1 | hp2 | fh | gh], bf16
    wuu_ref : (Hp, 2*Hp)     un->hidden weights     [fu | gu], bf16
    bfg_ref : (1, 2*Hp)      combined f/g biases, f32
    hs_ref  : (TT, Bt, Hp)   hidden states emitted for this chunk
    h_scr   : (Bt, Hp)       recurrent hidden state (persists across time chunks)
    """
    c = pl.program_id(1)   # time-chunk axis (sequential)

    @pl.when(c == 0)
    def _():
        h_scr[...] = jnp.zeros_like(h_scr)

    TT, Bt, _ = ixp_ref.shape
    Hp = h_scr.shape[1]

    # Hoist loop-invariant loads / broadcasts above the time loop.
    whh = whh_ref[...]                                      # (Hp, 5*Hp) bf16
    wuu = wuu_ref[...]                                      # (Hp, 2*Hp) bf16
    bfg = jnp.broadcast_to(bfg_ref[...], (Bt, 2 * Hp))      # (Bt, 2*Hp) f32

    def step(t, h):
        ixp = ixp_ref[t]                                    # (Bt, 3*Hp) f32
        hW = jnp.dot(h.astype(jnp.bfloat16), whh,
                     preferred_element_type=jnp.float32)    # (Bt, 5*Hp)

        # 128-lane-aligned gate slices (vreg-boundary, no XLU work).
        a = jnp.tanh(ixp[:, 0:Hp] + hW[:, 0:Hp])
        p1 = jnp.tanh(ixp[:, Hp:2 * Hp] + hW[:, Hp:2 * Hp])
        p2 = jnp.tanh(ixp[:, 2 * Hp:3 * Hp] + hW[:, 2 * Hp:3 * Hp])

        # Depth-3 multiply tree instead of a 5-deep chain.
        un = (a * (1.0 - a)) * ((p1 * (1.0 - p1)) * (p2 * (1.0 - p2)))

        uW = jnp.dot(un.astype(jnp.bfloat16), wuu,
                     preferred_element_type=jnp.float32) + bfg

        f = jax.nn.sigmoid(uW[:, 0:Hp] + hW[:, 3 * Hp:4 * Hp])
        g = jnp.tanh(uW[:, Hp:2 * Hp] + hW[:, 4 * Hp:5 * Hp])

        h_next = g + f * (h - g)        # == f*h + (1-f)*g
        hs_ref[t] = h_next              # lane-dense (Hp=128k) store
        return h_next

    # Unrolling gives the LLO scheduler visibility to overlap step t's
    # elementwise/EUP tail with step t+1's MXU push and the output store.
    unroll = True if TT <= 64 else 16
    h_final = jax.lax.fori_loop(0, TT, step, h_scr[...], unroll=unroll)
    h_scr[...] = h_final


def _round_up(n, m):
    return (n + m - 1) // m * m


@jax.jit
def net_forward(x, win, whh, wuu, b, wout, bout):
    """x: [B, T, 2] -> [B, T, 2] (matches NET.forward)."""
    B, T, _ = x.shape
    H = whh.shape[0]
    Hp = _round_up(H, 128)               # lane-align each gate slab

    Bp = _round_up(B, 8)                 # pad batch to f32 sublane tile
    # Split batch into 2 tiles (parallel grid axis) when large enough so v7x's
    # second TensorCore gets half; neutral (single tile) for small batches.
    nb = 2 if (Bp >= 16 and Bp % 16 == 0) else 1
    Bt = Bp // nb

    # Time-chunk size from an explicit VMEM budget (double-buffered in + out),
    # balanced across chunks so padded serial steps are < num_chunks.
    vmem_budget = 24 * 1024 * 1024
    bytes_per_step = (3 * Hp + Hp) * Bt * 4 * 2
    cap = int(min(512, max(8, vmem_budget // bytes_per_step)))
    if T <= cap:
        TT, num_chunks = T, 1
    else:
        num_chunks = -(-T // cap)
        TT = -(-T // num_chunks)
    Tp = TT * num_chunks

    # ---- Pack weights with 128-lane-aligned gate slabs; matmul weights -> bf16.
    def pad_gates(w, n_gates):
        wg = w.reshape(H, n_gates, H)
        wg = jnp.pad(wg, ((0, Hp - H), (0, 0), (0, Hp - H)))
        return wg.reshape(Hp, n_gates * Hp)

    whh_p = pad_gates(whh, 5).astype(jnp.bfloat16)        # (Hp, 5*Hp)
    wuu_p = pad_gates(wuu, 2).astype(jnp.bfloat16)        # (Hp, 2*Hp)

    b_pad = jnp.pad(b, ((0, 0), (0, Hp - H)))             # (5, Hp)
    win_p = jnp.pad(win, ((0, 0), (0, Hp - H)))           # (3, Hp)
    bfg = jnp.concatenate([b_pad[3], b_pad[4]])[None, :]  # (1, 2*Hp)

    # ---- Precompute input->hidden projections directly in [T, B, 3*Hp] layout.
    xt = jnp.transpose(x, (1, 0, 2))                      # [T, B, 2] (tiny)
    xv = xt[..., 0:1]
    th = xt[..., 1:2]
    ia = xv * win_p[0] + b_pad[0]                         # [T, B, Hp]
    ip1 = jnp.cos(th) * win_p[1] + b_pad[1]
    ip2 = jnp.sin(th) * win_p[2] + b_pad[2]
    ixp = jnp.concatenate([ia, ip1, ip2], axis=-1)        # [T, B, 3*Hp]
    ixp = jnp.pad(ixp, ((0, Tp - T), (0, Bp - B), (0, 0)))

    hs = pl.pallas_call(
        gru_chunk_kernel,
        out_shape=jax.ShapeDtypeStruct((Tp, Bp, Hp), jnp.float32),
        grid_spec=pltpu.PrefetchScalarGridSpec(
            num_scalar_prefetch=0,
            grid=(nb, num_chunks),            # (batch tiles, time chunks)
            in_specs=[
                pl.BlockSpec((TT, Bt, 3 * Hp), lambda bt, c: (c, bt, 0)),  # ixp
                pl.BlockSpec((Hp, 5 * Hp), lambda bt, c: (0, 0)),          # whh
                pl.BlockSpec((Hp, 2 * Hp), lambda bt, c: (0, 0)),          # wuu
                pl.BlockSpec((1, 2 * Hp), lambda bt, c: (0, 0)),           # f/g bias
            ],
            out_specs=pl.BlockSpec((TT, Bt, Hp), lambda bt, c: (c, bt, 0)),
            scratch_shapes=[pltpu.VMEM((Bt, Hp), jnp.float32)],
        ),
        compiler_params=pltpu.CompilerParams(
            dimension_semantics=("parallel", "arbitrary"),
            vmem_limit_bytes=32 * 1024 * 1024),
    )(ixp, whh_p, wuu_p, bfg)

    hs = hs[:T, :B, :H]                                    # strip pads
    out = jnp.einsum('tbh,ho->tbo', hs, wout) + bout[0]    # [T, B, 2]
    return jnp.transpose(out, (1, 0, 2))                   # [B, T, 2]


def init_params(key, hidden_size):
    """Deterministic parameter init mirroring the PyTorch module shapes."""
    H = hidden_size
    ks = jax.random.split(key, 14)

    def xavier(k, fan_in, fan_out, shape):
        bound = np.sqrt(6.0 / (fan_in + fan_out))
        return jax.random.uniform(k, shape, jnp.float32, -bound, bound)

    # input->hidden (torch weight shape (H, 1)) -> stored as (H,) rows.
    w_ia = xavier(ks[0], 1, H, (H,))
    w_ip1 = xavier(ks[1], 1, H, (H,))
    w_ip2 = xavier(ks[2], 1, H, (H,))
    win = jnp.stack([w_ia, w_ip1, w_ip2], axis=0)            # (3, H)

    # hidden->hidden weights, torch Linear: y = x @ W.T, W shape (H, H).
    def hh(k):
        return xavier(k, H, H, (H, H)).T                     # pre-transpose

    whh = jnp.concatenate([hh(ks[3]), hh(ks[4]), hh(ks[5]),
                           hh(ks[6]), hh(ks[7])], axis=1)    # (H, 5H)
    wuu = jnp.concatenate([hh(ks[8]), hh(ks[9])], axis=1)    # (H, 2H)

    # All CustomGRU biases are zero-initialized in the reference module; each
    # row here is the *combined* input-side + hidden-side bias per gate.
    b = jnp.zeros((5, H), jnp.float32)

    # Final Linear(hidden_size, 2).
    wout = xavier(ks[10], H, 2, (H, 2))
    bout = jax.random.uniform(ks[11], (1, 2), jnp.float32,
                              -1.0 / np.sqrt(H), 1.0 / np.sqrt(H))
    return win, whh, wuu, b, wout, bout


def reference_forward(x, win, whh, wuu, b, wout, bout):
    """Pure-JAX f32 reference of NET.forward for validation."""
    B, T, _ = x.shape
    H = whh.shape[0]

    def step(h, xt):
        xv = xt[:, 0:1]
        th = xt[:, 1:2]
        hW = h @ whh
        a = jnp.tanh(xv * win[0:1] + hW[:, 0 * H:1 * H] + b[0:1])
        p1 = jnp.tanh(jnp.cos(th) * win[1:2] + hW[:, 1 * H:2 * H] + b[1:2])
        p2 = jnp.tanh(jnp.sin(th) * win[2:3] + hW[:, 2 * H:3 * H] + b[2:3])
        un = a * p1 * p2 * (1 - a) * (1 - p1) * (1 - p2)
        uW = un @ wuu
        f = jax.nn.sigmoid(uW[:, 0:H] + hW[:, 3 * H:4 * H] + b[3:4])
        g = jnp.tanh(uW[:, H:2 * H] + hW[:, 4 * H:5 * H] + b[4:5])
        h_next = f * h + (1 - f) * g
        return h_next, h_next

    h0 = jnp.zeros((B, H), jnp.float32)
    _, hs = jax.lax.scan(step, h0, jnp.transpose(x, (1, 0, 2)))
    hs = jnp.transpose(hs, (1, 0, 2))        # [B, T, H]
    return hs @ wout + bout[0]


if __name__ == "__main__":
    B, T, H = 4, 8, 32
    key = jax.random.PRNGKey(0)
    kx, kp = jax.random.split(key)

    x = jax.random.normal(kx, (B, T, 2), jnp.float32)
    params = init_params(kp, H)

    out = net_forward(x, *params)
    out = jax.block_until_ready(out)

    ref = reference_forward(x, *params)
    # bf16 matmul operands in the kernel vs f32 reference -> looser tolerance.
    np.testing.assert_allclose(np.asarray(out), np.asarray(ref),
                               rtol=3e-2, atol=3e-2)

    assert out.shape == (B, T, 2)
    print("KERNEL_OK")
</pallas_src>

<mosaic_0001>
module attributes {stable_mosaic.version = 11 : i64} {
  func.func @gru_chunk_kernel(%arg0: i32, %arg1: i32, %arg2: memref<8x8x384xf32, #tpu.memory_space<vmem>>, %arg3: memref<128x640xbf16, #tpu.memory_space<vmem>>, %arg4: memref<128x256xbf16, #tpu.memory_space<vmem>>, %arg5: memref<1x256xf32, #tpu.memory_space<vmem>>, %arg6: memref<8x8x128xf32, #tpu.memory_space<vmem>>, %arg7: memref<8x128xf32, #tpu.memory_space<vmem>>) attributes {dimension_semantics = [#tpu.dimension_semantics<parallel>, #tpu.dimension_semantics<arbitrary>], iteration_bounds = array<i64: 1, 1>, scalar_prefetch = 0 : i64, scratch_operands = 1 : i64, tpu.core_type = #tpu.core_type<tc>, window_params = [{transform_indices = @transform_0, window_bounds = array<i64: 8, 8, 384>}, {pipeline_mode = #tpu.pipeline_mode<synchronous>, transform_indices = @transform_1, window_bounds = array<i64: 128, 640>}, {pipeline_mode = #tpu.pipeline_mode<synchronous>, transform_indices = @transform_2, window_bounds = array<i64: 128, 256>}, {pipeline_mode = #tpu.pipeline_mode<synchronous>, transform_indices = @transform_3, window_bounds = array<i64: 1, 256>}, {transform_indices = @transform_4, window_bounds = array<i64: 8, 8, 128>}]} {
    %c0_i32 = arith.constant 0 : i32
    %0 = arith.cmpi eq, %arg1, %c0_i32 : i32
    %1 = arith.extui %0 : i1 to i32
    %c0_i32_0 = arith.constant 0 : i32
    %2 = arith.cmpi ne, %1, %c0_i32_0 : i32
    scf.if %2 {
      %cst_90 = arith.constant 0.000000e+00 : f32
      %410 = vector.broadcast %cst_90 : f32 to vector<8x128xf32>
      %c0_91 = arith.constant 0 : index
      %c0_92 = arith.constant 0 : index
      %411 = vector.load %arg7[%c0_91, %c0_92] : memref<8x128xf32, #tpu.memory_space<vmem>>, vector<8x128xf32>
      tpu.vector_store %arg7[%c0_91, %c0_92], %410 {strides = array<i32>} : memref<8x128xf32, #tpu.memory_space<vmem>>, vector<8x128xf32>,
    } else {
    }
    %c0 = arith.constant 0 : index
    %c0_1 = arith.constant 0 : index
    %3 = vector.load %arg3[%c0, %c0_1] : memref<128x640xbf16, #tpu.memory_space<vmem>>, vector<128x640xbf16>
    %c0_2 = arith.constant 0 : index
    %c0_3 = arith.constant 0 : index
    %4 = vector.load %arg4[%c0_2, %c0_3] : memref<128x256xbf16, #tpu.memory_space<vmem>>, vector<128x256xbf16>
    %c0_4 = arith.constant 0 : index
    %c0_5 = arith.constant 0 : index
    %5 = vector.load %arg5[%c0_4, %c0_5] : memref<1x256xf32, #tpu.memory_space<vmem>>, vector<1x256xf32>
    %6 = vector.shape_cast %5 : vector<1x256xf32> to vector<1x256xf32>
    %7 = vector.broadcast %6 : vector<1x256xf32> to vector<8x256xf32>
    %c0_6 = arith.constant 0 : index
    %c0_7 = arith.constant 0 : index
    %8 = vector.load %arg7[%c0_6, %c0_7] : memref<8x128xf32, #tpu.memory_space<vmem>>, vector<8x128xf32>
    %c0_i32_8 = arith.constant 0 : i32
    %9 = arith.index_cast %c0_i32_8 : i32 to index
    %c0_9 = arith.constant 0 : index
    %c0_10 = arith.constant 0 : index
    %10 = vector.load %arg2[%9, %c0_9, %c0_10] : memref<8x8x384xf32, #tpu.memory_space<vmem>>, vector<1x8x384xf32>
    %11 = vector.shape_cast %10 : vector<1x8x384xf32> to vector<8x384xf32>
    %12 = arith.truncf %8 : vector<8x128xf32> to vector<8x128xbf16>
    %cst = arith.constant dense<0.000000e+00> : vector<8x640xf32>
    %13 = tpu.matmul %12, %3, %cst {dimension_numbers = #tpu.dot_dimension_numbers<[1], [0], [0], [1], [0, 0, 1, 1], [], []>} : vector<8x128xbf16>, vector<128x640xbf16>, vector<8x640xf32> -> vector<8x640xf32>
    %14 = vector.extract_strided_slice %11 {offsets = [0, 0], sizes = [8, 128], strides = [1, 1]} : vector<8x384xf32> to vector<8x128xf32>
    %15 = vector.extract_strided_slice %13 {offsets = [0, 0], sizes = [8, 128], strides = [1, 1]} : vector<8x640xf32> to vector<8x128xf32>
    %16 = arith.addf %14, %15 : vector<8x128xf32>
    %17 = math.tanh %16 : vector<8x128xf32>
    %18 = vector.extract_strided_slice %11 {offsets = [0, 128], sizes = [8, 128], strides = [1, 1]} : vector<8x384xf32> to vector<8x128xf32>
    %19 = vector.extract_strided_slice %13 {offsets = [0, 128], sizes = [8, 128], strides = [1, 1]} : vector<8x640xf32> to vector<8x128xf32>
    %20 = arith.addf %18, %19 : vector<8x128xf32>
    %21 = math.tanh %20 : vector<8x128xf32>
    %22 = vector.extract_strided_slice %11 {offsets = [0, 256], sizes = [8, 128], strides = [1, 1]} : vector<8x384xf32> to vector<8x128xf32>
    %23 = vector.extract_strided_slice %13 {offsets = [0, 256], sizes = [8, 128], strides = [1, 1]} : vector<8x640xf32> to vector<8x128xf32>
    %24 = arith.addf %22, %23 : vector<8x128xf32>
    %25 = math.tanh %24 : vector<8x128xf32>
    %cst_11 = arith.constant 1.000000e+00 : f32
    %26 = vector.broadcast %cst_11 : f32 to vector<8x128xf32>
    %27 = arith.subf %26, %17 : vector<8x128xf32>
    %28 = arith.mulf %17, %27 : vector<8x128xf32>
    %cst_12 = arith.constant 1.000000e+00 : f32
    %29 = vector.broadcast %cst_12 : f32 to vector<8x128xf32>
    %30 = arith.subf %29, %21 : vector<8x128xf32>
    %31 = arith.mulf %21, %30 : vector<8x128xf32>
    %cst_13 = arith.constant 1.000000e+00 : f32
    %32 = vector.broadcast %cst_13 : f32 to vector<8x128xf32>
    %33 = arith.subf %32, %25 : vector<8x128xf32>
    %34 = arith.mulf %25, %33 : vector<8x128xf32>
    %35 = arith.mulf %31, %34 : vector<8x128xf32>
    %36 = arith.mulf %28, %35 : vector<8x128xf32>
    %37 = arith.truncf %36 : vector<8x128xf32> to vector<8x128xbf16>
    %cst_14 = arith.constant dense<0.000000e+00> : vector<8x256xf32>
    %38 = tpu.matmul %37, %4, %cst_14 {dimension_numbers = #tpu.dot_dimension_numbers<[1], [0], [0], [1], [0, 0, 1, 1], [], []>} : vector<8x128xbf16>, vector<128x256xbf16>, vector<8x256xf32> -> vector<8x256xf32>
    %39 = arith.addf %38, %7 : vector<8x256xf32>
    %40 = vector.extract_strided_slice %39 {offsets = [0, 0], sizes = [8, 128], strides = [1, 1]} : vector<8x256xf32> to vector<8x128xf32>
    %41 = vector.extract_strided_slice %13 {offsets = [0, 384], sizes = [8, 128], strides = [1, 1]} : vector<8x640xf32> to vector<8x128xf32>
    %42 = arith.addf %40, %41 : vector<8x128xf32>
    %43 = arith.negf %42 : vector<8x128xf32>
    %44 = math.exp %43 : vector<8x128xf32>
    %cst_15 = arith.constant 1.000000e+00 : f32
    %45 = vector.broadcast %cst_15 : f32 to vector<8x128xf32>
    %46 = arith.addf %45, %44 : vector<8x128xf32>
    %47 = arith.divf %45, %46 : vector<8x128xf32>
    %48 = vector.extract_strided_slice %39 {offsets = [0, 128], sizes = [8, 128], strides = [1, 1]} : vector<8x256xf32> to vector<8x128xf32>
    %49 = vector.extract_strided_slice %13 {offsets = [0, 512], sizes = [8, 128], strides = [1, 1]} : vector<8x640xf32> to vector<8x128xf32>
    %50 = arith.addf %48, %49 : vector<8x128xf32>
    %51 = math.tanh %50 : vector<8x128xf32>
    %52 = arith.subf %8, %51 : vector<8x128xf32>
    %53 = arith.mulf %47, %52 : vector<8x128xf32>
    %54 = arith.addf %51, %53 : vector<8x128xf32>
    %55 = arith.index_cast %c0_i32_8 : i32 to index
    %c0_16 = arith.constant 0 : index
    %c0_17 = arith.constant 0 : index
    %56 = vector.load %arg6[%55, %c0_16, %c0_17] : memref<8x8x128xf32, #tpu.memory_space<vmem>>, vector<1x8x128xf32>
    %57 = vector.shape_cast %56 : vector<1x8x128xf32> to vector<8x128xf32>
    %58 = vector.shape_cast %54 : vector<8x128xf32> to vector<1x8x128xf32>
    tpu.vector_store %arg6[%55, %c0_16, %c0_17], %58 {strides = array<i32>} : memref<8x8x128xf32, #tpu.memory_space<vmem>>, vector<1x8x128xf32>,
    %c1_i32 = arith.constant 1 : i32
    %59 = arith.index_cast %c1_i32 : i32 to index
    %c0_18 = arith.constant 0 : index
    %c0_19 = arith.constant 0 : index
    %60 = vector.load %arg2[%59, %c0_18, %c0_19] : memref<8x8x384xf32, #tpu.memory_space<vmem>>, vector<1x8x384xf32>
    %61 = vector.shape_cast %60 : vector<1x8x384xf32> to vector<8x384xf32>
    %62 = arith.truncf %54 : vector<8x128xf32> to vector<8x128xbf16>
    %cst_20 = arith.constant dense<0.000000e+00> : vector<8x640xf32>
    %63 = tpu.matmul %62, %3, %cst_20 {dimension_numbers = #tpu.dot_dimension_numbers<[1], [0], [0], [1], [0, 0, 1, 1], [], []>} : vector<8x128xbf16>, vector<128x640xbf16>, vector<8x640xf32> -> vector<8x640xf32>
    %64 = vector.extract_strided_slice %61 {offsets = [0, 0], sizes = [8, 128], strides = [1, 1]} : vector<8x384xf32> to vector<8x128xf32>
    %65 = vector.extract_strided_slice %63 {offsets = [0, 0], sizes = [8, 128], strides = [1, 1]} : vector<8x640xf32> to vector<8x128xf32>
    %66 = arith.addf %64, %65 : vector<8x128xf32>
    %67 = math.tanh %66 : vector<8x128xf32>
    %68 = vector.extract_strided_slice %61 {offsets = [0, 128], sizes = [8, 128], strides = [1, 1]} : vector<8x384xf32> to vector<8x128xf32>
    %69 = vector.extract_strided_slice %63 {offsets = [0, 128], sizes = [8, 128], strides = [1, 1]} : vector<8x640xf32> to vector<8x128xf32>
    %70 = arith.addf %68, %69 : vector<8x128xf32>
    %71 = math.tanh %70 : vector<8x128xf32>
    %72 = vector.extract_strided_slice %61 {offsets = [0, 256], sizes = [8, 128], strides = [1, 1]} : vector<8x384xf32> to vector<8x128xf32>
    %73 = vector.extract_strided_slice %63 {offsets = [0, 256], sizes = [8, 128], strides = [1, 1]} : vector<8x640xf32> to vector<8x128xf32>
    %74 = arith.addf %72, %73 : vector<8x128xf32>
    %75 = math.tanh %74 : vector<8x128xf32>
    %cst_21 = arith.constant 1.000000e+00 : f32
    %76 = vector.broadcast %cst_21 : f32 to vector<8x128xf32>
    %77 = arith.subf %76, %67 : vector<8x128xf32>
    %78 = arith.mulf %67, %77 : vector<8x128xf32>
    %cst_22 = arith.constant 1.000000e+00 : f32
    %79 = vector.broadcast %cst_22 : f32 to vector<8x128xf32>
    %80 = arith.subf %79, %71 : vector<8x128xf32>
    %81 = arith.mulf %71, %80 : vector<8x128xf32>
    %cst_23 = arith.constant 1.000000e+00 : f32
    %82 = vector.broadcast %cst_23 : f32 to vector<8x128xf32>
    %83 = arith.subf %82, %75 : vector<8x128xf32>
    %84 = arith.mulf %75, %83 : vector<8x128xf32>
    %85 = arith.mulf %81, %84 : vector<8x128xf32>
    %86 = arith.mulf %78, %85 : vector<8x128xf32>
    %87 = arith.truncf %86 : vector<8x128xf32> to vector<8x128xbf16>
    %cst_24 = arith.constant dense<0.000000e+00> : vector<8x256xf32>
    %88 = tpu.matmul %87, %4, %cst_24 {dimension_numbers = #tpu.dot_dimension_numbers<[1], [0], [0], [1], [0, 0, 1, 1], [], []>} : vector<8x128xbf16>, vector<128x256xbf16>, vector<8x256xf32> -> vector<8x256xf32>
    %89 = arith.addf %88, %7 : vector<8x256xf32>
    %90 = vector.extract_strided_slice %89 {offsets = [0, 0], sizes = [8, 128], strides = [1, 1]} : vector<8x256xf32> to vector<8x128xf32>
    %91 = vector.extract_strided_slice %63 {offsets = [0, 384], sizes = [8, 128], strides = [1, 1]} : vector<8x640xf32> to vector<8x128xf32>
    %92 = arith.addf %90, %91 : vector<8x128xf32>
    %93 = arith.negf %92 : vector<8x128xf32>
    %94 = math.exp %93 : vector<8x128xf32>
    %cst_25 = arith.constant 1.000000e+00 : f32
    %95 = vector.broadcast %cst_25 : f32 to vector<8x128xf32>
    %96 = arith.addf %95, %94 : vector<8x128xf32>
    %97 = arith.divf %95, %96 : vector<8x128xf32>
    %98 = vector.extract_strided_slice %89 {offsets = [0, 128], sizes = [8, 128], strides = [1, 1]} : vector<8x256xf32> to vector<8x128xf32>
    %99 = vector.extract_strided_slice %63 {offsets = [0, 512], sizes = [8, 128], strides = [1, 1]} : vector<8x640xf32> to vector<8x128xf32>
    %100 = arith.addf %98, %99 : vector<8x128xf32>
    %101 = math.tanh %100 : vector<8x128xf32>
    %102 = arith.subf %54, %101 : vector<8x128xf32>
    %103 = arith.mulf %97, %102 : vector<8x128xf32>
    %104 = arith.addf %101, %103 : vector<8x128xf32>
    %105 = arith.index_cast %c1_i32 : i32 to index
    %c0_26 = arith.constant 0 : index
    %c0_27 = arith.constant 0 : index
    %106 = vector.load %arg6[%105, %c0_26, %c0_27] : memref<8x8x128xf32, #tpu.memory_space<vmem>>, vector<1x8x128xf32>
    %107 = vector.shape_cast %106 : vector<1x8x128xf32> to vector<8x128xf32>
    %108 = vector.shape_cast %104 : vector<8x128xf32> to vector<1x8x128xf32>
    tpu.vector_store %arg6[%105, %c0_26, %c0_27], %108 {strides = array<i32>} : memref<8x8x128xf32, #tpu.memory_space<vmem>>, vector<1x8x128xf32>,
    %c2_i32 = arith.constant 2 : i32
    %109 = arith.index_cast %c2_i32 : i32 to index
    %c0_28 = arith.constant 0 : index
    %c0_29 = arith.constant 0 : index
    %110 = vector.load %arg2[%109, %c0_28, %c0_29] : memref<8x8x384xf32, #tpu.memory_space<vmem>>, vector<1x8x384xf32>
    %111 = vector.shape_cast %110 : vector<1x8x384xf32> to vector<8x384xf32>
    %112 = arith.truncf %104 : vector<8x128xf32> to vector<8x128xbf16>
    %cst_30 = arith.constant dense<0.000000e+00> : vector<8x640xf32>
    %113 = tpu.matmul %112, %3, %cst_30 {dimension_numbers = #tpu.dot_dimension_numbers<[1], [0], [0], [1], [0, 0, 1, 1], [], []>} : vector<8x128xbf16>, vector<128x640xbf16>, vector<8x640xf32> -> vector<8x640xf32>
    %114 = vector.extract_strided_slice %111 {offsets = [0, 0], sizes = [8, 128], strides = [1, 1]} : vector<8x384xf32> to vector<8x128xf32>
    %115 = vector.extract_strided_slice %113 {offsets = [0, 0], sizes = [8, 128], strides = [1, 1]} : vector<8x640xf32> to vector<8x128xf32>
    %116 = arith.addf %114, %115 : vector<8x128xf32>
    %117 = math.tanh %116 : vector<8x128xf32>
    %118 = vector.extract_strided_slice %111 {offsets = [0, 128], sizes = [8, 128], strides = [1, 1]} : vector<8x384xf32> to vector<8x128xf32>
    %119 = vector.extract_strided_slice %113 {offsets = [0, 128], sizes = [8, 128], strides = [1, 1]} : vector<8x640xf32> to vector<8x128xf32>
    %120 = arith.addf %118, %119 : vector<8x128xf32>
    %121 = math.tanh %120 : vector<8x128xf32>
    %122 = vector.extract_strided_slice %111 {offsets = [0, 256], sizes = [8, 128], strides = [1, 1]} : vector<8x384xf32> to vector<8x128xf32>
    %123 = vector.extract_strided_slice %113 {offsets = [0, 256], sizes = [8, 128], strides = [1, 1]} : vector<8x640xf32> to vector<8x128xf32>
    %124 = arith.addf %122, %123 : vector<8x128xf32>
    %125 = math.tanh %124 : vector<8x128xf32>
    %cst_31 = arith.constant 1.000000e+00 : f32
    %126 = vector.broadcast %cst_31 : f32 to vector<8x128xf32>
    %127 = arith.subf %126, %117 : vector<8x128xf32>
    %128 = arith.mulf %117, %127 : vector<8x128xf32>
    %cst_32 = arith.constant 1.000000e+00 : f32
    %129 = vector.broadcast %cst_32 : f32 to vector<8x128xf32>
    %130 = arith.subf %129, %121 : vector<8x128xf32>
    %131 = arith.mulf %121, %130 : vector<8x128xf32>
    %cst_33 = arith.constant 1.000000e+00 : f32
    %132 = vector.broadcast %cst_33 : f32 to vector<8x128xf32>
    %133 = arith.subf %132, %125 : vector<8x128xf32>
    %134 = arith.mulf %125, %133 : vector<8x128xf32>
    %135 = arith.mulf %131, %134 : vector<8x128xf32>
    %136 = arith.mulf %128, %135 : vector<8x128xf32>
    %137 = arith.truncf %136 : vector<8x128xf32> to vector<8x128xbf16>
    %cst_34 = arith.constant dense<0.000000e+00> : vector<8x256xf32>
    %138 = tpu.matmul %137, %4, %cst_34 {dimension_numbers = #tpu.dot_dimension_numbers<[1], [0], [0], [1], [0, 0, 1, 1], [], []>} : vector<8x128xbf16>, vector<128x256xbf16>, vector<8x256xf32> -> vector<8x256xf32>
    %139 = arith.addf %138, %7 : vector<8x256xf32>
    %140 = vector.extract_strided_slice %139 {offsets = [0, 0], sizes = [8, 128], strides = [1, 1]} : vector<8x256xf32> to vector<8x128xf32>
    %141 = vector.extract_strided_slice %113 {offsets = [0, 384], sizes = [8, 128], strides = [1, 1]} : vector<8x640xf32> to vector<8x128xf32>
    %142 = arith.addf %140, %141 : vector<8x128xf32>
    %143 = arith.negf %142 : vector<8x128xf32>
    %144 = math.exp %143 : vector<8x128xf32>
    %cst_35 = arith.constant 1.000000e+00 : f32
    %145 = vector.broadcast %cst_35 : f32 to vector<8x128xf32>
    %146 = arith.addf %145, %144 : vector<8x128xf32>
    %147 = arith.divf %145, %146 : vector<8x128xf32>
    %148 = vector.extract_strided_slice %139 {offsets = [0, 128], sizes = [8, 128], strides = [1, 1]} : vector<8x256xf32> to vector<8x128xf32>
    %149 = vector.extract_strided_slice %113 {offsets = [0, 512], sizes = [8, 128], strides = [1, 1]} : vector<8x640xf32> to vector<8x128xf32>
    %150 = arith.addf %148, %149 : vector<8x128xf32>
    %151 = math.tanh %150 : vector<8x128xf32>
    %152 = arith.subf %104, %151 : vector<8x128xf32>
    %153 = arith.mulf %147, %152 : vector<8x128xf32>
    %154 = arith.addf %151, %153 : vector<8x128xf32>
    %155 = arith.index_cast %c2_i32 : i32 to index
    %c0_36 = arith.constant 0 : index
    %c0_37 = arith.constant 0 : index
    %156 = vector.load %arg6[%155, %c0_36, %c0_37] : memref<8x8x128xf32, #tpu.memory_space<vmem>>, vector<1x8x128xf32>
    %157 = vector.shape_cast %156 : vector<1x8x128xf32> to vector<8x128xf32>
    %158 = vector.shape_cast %154 : vector<8x128xf32> to vector<1x8x128xf32>
    tpu.vector_store %arg6[%155, %c0_36, %c0_37], %158 {strides = array<i32>} : memref<8x8x128xf32, #tpu.memory_space<vmem>>, vector<1x8x128xf32>,
    %c3_i32 = arith.constant 3 : i32
    %159 = arith.index_cast %c3_i32 : i32 to index
    %c0_38 = arith.constant 0 : index
    %c0_39 = arith.constant 0 : index
    %160 = vector.load %arg2[%159, %c0_38, %c0_39] : memref<8x8x384xf32, #tpu.memory_space<vmem>>, vector<1x8x384xf32>
    %161 = vector.shape_cast %160 : vector<1x8x384xf32> to vector<8x384xf32>
    %162 = arith.truncf %154 : vector<8x128xf32> to vector<8x128xbf16>
    %cst_40 = arith.constant dense<0.000000e+00> : vector<8x640xf32>
    %163 = tpu.matmul %162, %3, %cst_40 {dimension_numbers = #tpu.dot_dimension_numbers<[1], [0], [0], [1], [0, 0, 1, 1], [], []>} : vector<8x128xbf16>, vector<128x640xbf16>, vector<8x640xf32> -> vector<8x640xf32>
    %164 = vector.extract_strided_slice %161 {offsets = [0, 0], sizes = [8, 128], strides = [1, 1]} : vector<8x384xf32> to vector<8x128xf32>
    %165 = vector.extract_strided_slice %163 {offsets = [0, 0], sizes = [8, 128], strides = [1, 1]} : vector<8x640xf32> to vector<8x128xf32>
    %166 = arith.addf %164, %165 : vector<8x128xf32>
    %167 = math.tanh %166 : vector<8x128xf32>
    %168 = vector.extract_strided_slice %161 {offsets = [0, 128], sizes = [8, 128], strides = [1, 1]} : vector<8x384xf32> to vector<8x128xf32>
    %169 = vector.extract_strided_slice %163 {offsets = [0, 128], sizes = [8, 128], strides = [1, 1]} : vector<8x640xf32> to vector<8x128xf32>
    %170 = arith.addf %168, %169 : vector<8x128xf32>
    %171 = math.tanh %170 : vector<8x128xf32>
    %172 = vector.extract_strided_slice %161 {offsets = [0, 256], sizes = [8, 128], strides = [1, 1]} : vector<8x384xf32> to vector<8x128xf32>
    %173 = vector.extract_strided_slice %163 {offsets = [0, 256], sizes = [8, 128], strides = [1, 1]} : vector<8x640xf32> to vector<8x128xf32>
    %174 = arith.addf %172, %173 : vector<8x128xf32>
    %175 = math.tanh %174 : vector<8x128xf32>
    %cst_41 = arith.constant 1.000000e+00 : f32
    %176 = vector.broadcast %cst_41 : f32 to vector<8x128xf32>
    %177 = arith.subf %176, %167 : vector<8x128xf32>
    %178 = arith.mulf %167, %177 : vector<8x128xf32>
    %cst_42 = arith.constant 1.000000e+00 : f32
    %179 = vector.broadcast %cst_42 : f32 to vector<8x128xf32>
    %180 = arith.subf %179, %171 : vector<8x128xf32>
    %181 = arith.mulf %171, %180 : vector<8x128xf32>
    %cst_43 = arith.constant 1.000000e+00 : f32
    %182 = vector.broadcast %cst_43 : f32 to vector<8x128xf32>
    %183 = arith.subf %182, %175 : vector<8x128xf32>
    %184 = arith.mulf %175, %183 : vector<8x128xf32>
    %185 = arith.mulf %181, %184 : vector<8x128xf32>
    %186 = arith.mulf %178, %185 : vector<8x128xf32>
    %187 = arith.truncf %186 : vector<8x128xf32> to vector<8x128xbf16>
    %cst_44 = arith.constant dense<0.000000e+00> : vector<8x256xf32>
    %188 = tpu.matmul %187, %4, %cst_44 {dimension_numbers = #tpu.dot_dimension_numbers<[1], [0], [0], [1], [0, 0, 1, 1], [], []>} : vector<8x128xbf16>, vector<128x256xbf16>, vector<8x256xf32> -> vector<8x256xf32>
    %189 = arith.addf %188, %7 : vector<8x256xf32>
    %190 = vector.extract_strided_slice %189 {offsets = [0, 0], sizes = [8, 128], strides = [1, 1]} : vector<8x256xf32> to vector<8x128xf32>
    %191 = vector.extract_strided_slice %163 {offsets = [0, 384], sizes = [8, 128], strides = [1, 1]} : vector<8x640xf32> to vector<8x128xf32>
    %192 = arith.addf %190, %191 : vector<8x128xf32>
    %193 = arith.negf %192 : vector<8x128xf32>
    %194 = math.exp %193 : vector<8x128xf32>
    %cst_45 = arith.constant 1.000000e+00 : f32
    %195 = vector.broadcast %cst_45 : f32 to vector<8x128xf32>
    %196 = arith.addf %195, %194 : vector<8x128xf32>
    %197 = arith.divf %195, %196 : vector<8x128xf32>
    %198 = vector.extract_strided_slice %189 {offsets = [0, 128], sizes = [8, 128], strides = [1, 1]} : vector<8x256xf32> to vector<8x128xf32>
    %199 = vector.extract_strided_slice %163 {offsets = [0, 512], sizes = [8, 128], strides = [1, 1]} : vector<8x640xf32> to vector<8x128xf32>
    %200 = arith.addf %198, %199 : vector<8x128xf32>
    %201 = math.tanh %200 : vector<8x128xf32>
    %202 = arith.subf %154, %201 : vector<8x128xf32>
    %203 = arith.mulf %197, %202 : vector<8x128xf32>
    %204 = arith.addf %201, %203 : vector<8x128xf32>
    %205 = arith.index_cast %c3_i32 : i32 to index
    %c0_46 = arith.constant 0 : index
    %c0_47 = arith.constant 0 : index
    %206 = vector.load %arg6[%205, %c0_46, %c0_47] : memref<8x8x128xf32, #tpu.memory_space<vmem>>, vector<1x8x128xf32>
    %207 = vector.shape_cast %206 : vector<1x8x128xf32> to vector<8x128xf32>
    %208 = vector.shape_cast %204 : vector<8x128xf32> to vector<1x8x128xf32>
    tpu.vector_store %arg6[%205, %c0_46, %c0_47], %208 {strides = array<i32>} : memref<8x8x128xf32, #tpu.memory_space<vmem>>, vector<1x8x128xf32>,
    %c4_i32 = arith.constant 4 : i32
    %209 = arith.index_cast %c4_i32 : i32 to index
    %c0_48 = arith.constant 0 : index
    %c0_49 = arith.constant 0 : index
    %210 = vector.load %arg2[%209, %c0_48, %c0_49] : memref<8x8x384xf32, #tpu.memory_space<vmem>>, vector<1x8x384xf32>
    %211 = vector.shape_cast %210 : vector<1x8x384xf32> to vector<8x384xf32>
    %212 = arith.truncf %204 : vector<8x128xf32> to vector<8x128xbf16>
    %cst_50 = arith.constant dense<0.000000e+00> : vector<8x640xf32>
    %213 = tpu.matmul %212, %3, %cst_50 {dimension_numbers = #tpu.dot_dimension_numbers<[1], [0], [0], [1], [0, 0, 1, 1], [], []>} : vector<8x128xbf16>, vector<128x640xbf16>, vector<8x640xf32> -> vector<8x640xf32>
    %214 = vector.extract_strided_slice %211 {offsets = [0, 0], sizes = [8, 128], strides = [1, 1]} : vector<8x384xf32> to vector<8x128xf32>
    %215 = vector.extract_strided_slice %213 {offsets = [0, 0], sizes = [8, 128], strides = [1, 1]} : vector<8x640xf32> to vector<8x128xf32>
    %216 = arith.addf %214, %215 : vector<8x128xf32>
    %217 = math.tanh %216 : vector<8x128xf32>
    %218 = vector.extract_strided_slice %211 {offsets = [0, 128], sizes = [8, 128], strides = [1, 1]} : vector<8x384xf32> to vector<8x128xf32>
    %219 = vector.extract_strided_slice %213 {offsets = [0, 128], sizes = [8, 128], strides = [1, 1]} : vector<8x640xf32> to vector<8x128xf32>
    %220 = arith.addf %218, %219 : vector<8x128xf32>
    %221 = math.tanh %220 : vector<8x128xf32>
    %222 = vector.extract_strided_slice %211 {offsets = [0, 256], sizes = [8, 128], strides = [1, 1]} : vector<8x384xf32> to vector<8x128xf32>
    %223 = vector.extract_strided_slice %213 {offsets = [0, 256], sizes = [8, 128], strides = [1, 1]} : vector<8x640xf32> to vector<8x128xf32>
    %224 = arith.addf %222, %223 : vector<8x128xf32>
    %225 = math.tanh %224 : vector<8x128xf32>
    %cst_51 = arith.constant 1.000000e+00 : f32
    %226 = vector.broadcast %cst_51 : f32 to vector<8x128xf32>
    %227 = arith.subf %226, %217 : vector<8x128xf32>
    %228 = arith.mulf %217, %227 : vector<8x128xf32>
    %cst_52 = arith.constant 1.000000e+00 : f32
    %229 = vector.broadcast %cst_52 : f32 to vector<8x128xf32>
    %230 = arith.subf %229, %221 : vector<8x128xf32>
    %231 = arith.mulf %221, %230 : vector<8x128xf32>
    %cst_53 = arith.constant 1.000000e+00 : f32
    %232 = vector.broadcast %cst_53 : f32 to vector<8x128xf32>
    %233 = arith.subf %232, %225 : vector<8x128xf32>
    %234 = arith.mulf %225, %233 : vector<8x128xf32>
    %235 = arith.mulf %231, %234 : vector<8x128xf32>
    %236 = arith.mulf %228, %235 : vector<8x128xf32>
    %237 = arith.truncf %236 : vector<8x128xf32> to vector<8x128xbf16>
    %cst_54 = arith.constant dense<0.000000e+00> : vector<8x256xf32>
    %238 = tpu.matmul %237, %4, %cst_54 {dimension_numbers = #tpu.dot_dimension_numbers<[1], [0], [0], [1], [0, 0, 1, 1], [], []>} : vector<8x128xbf16>, vector<128x256xbf16>, vector<8x256xf32> -> vector<8x256xf32>
    %239 = arith.addf %238, %7 : vector<8x256xf32>
    %240 = vector.extract_strided_slice %239 {offsets = [0, 0], sizes = [8, 128], strides = [1, 1]} : vector<8x256xf32> to vector<8x128xf32>
    %241 = vector.extract_strided_slice %213 {offsets = [0, 384], sizes = [8, 128], strides = [1, 1]} : vector<8x640xf32> to vector<8x128xf32>
    %242 = arith.addf %240, %241 : vector<8x128xf32>
    %243 = arith.negf %242 : vector<8x128xf32>
    %244 = math.exp %243 : vector<8x128xf32>
    %cst_55 = arith.constant 1.000000e+00 : f32
    %245 = vector.broadcast %cst_55 : f32 to vector<8x128xf32>
    %246 = arith.addf %245, %244 : vector<8x128xf32>
    %247 = arith.divf %245, %246 : vector<8x128xf32>
    %248 = vector.extract_strided_slice %239 {offsets = [0, 128], sizes = [8, 128], strides = [1, 1]} : vector<8x256xf32> to vector<8x128xf32>
    %249 = vector.extract_strided_slice %213 {offsets = [0, 512], sizes = [8, 128], strides = [1, 1]} : vector<8x640xf32> to vector<8x128xf32>
    %250 = arith.addf %248, %249 : vector<8x128xf32>
    %251 = math.tanh %250 : vector<8x128xf32>
    %252 = arith.subf %204, %251 : vector<8x128xf32>
    %253 = arith.mulf %247, %252 : vector<8x128xf32>
    %254 = arith.addf %251, %253 : vector<8x128xf32>
    %255 = arith.index_cast %c4_i32 : i32 to index
    %c0_56 = arith.constant 0 : index
    %c0_57 = arith.constant 0 : index
    %256 = vector.load %arg6[%255, %c0_56, %c0_57] : memref<8x8x128xf32, #tpu.memory_space<vmem>>, vector<1x8x128xf32>
    %257 = vector.shape_cast %256 : vector<1x8x128xf32> to vector<8x128xf32>
    %258 = vector.shape_cast %254 : vector<8x128xf32> to vector<1x8x128xf32>
    tpu.vector_store %arg6[%255, %c0_56, %c0_57], %258 {strides = array<i32>} : memref<8x8x128xf32, #tpu.memory_space<vmem>>, vector<1x8x128xf32>,
    %c5_i32 = arith.constant 5 : i32
    %259 = arith.index_cast %c5_i32 : i32 to index
    %c0_58 = arith.constant 0 : index
    %c0_59 = arith.constant 0 : index
    %260 = vector.load %arg2[%259, %c0_58, %c0_59] : memref<8x8x384xf32, #tpu.memory_space<vmem>>, vector<1x8x384xf32>
    %261 = vector.shape_cast %260 : vector<1x8x384xf32> to vector<8x384xf32>
    %262 = arith.truncf %254 : vector<8x128xf32> to vector<8x128xbf16>
    %cst_60 = arith.constant dense<0.000000e+00> : vector<8x640xf32>
    %263 = tpu.matmul %262, %3, %cst_60 {dimension_numbers = #tpu.dot_dimension_numbers<[1], [0], [0], [1], [0, 0, 1, 1], [], []>} : vector<8x128xbf16>, vector<128x640xbf16>, vector<8x640xf32> -> vector<8x640xf32>
    %264 = vector.extract_strided_slice %261 {offsets = [0, 0], sizes = [8, 128], strides = [1, 1]} : vector<8x384xf32> to vector<8x128xf32>
    %265 = vector.extract_strided_slice %263 {offsets = [0, 0], sizes = [8, 128], strides = [1, 1]} : vector<8x640xf32> to vector<8x128xf32>
    %266 = arith.addf %264, %265 : vector<8x128xf32>
    %267 = math.tanh %266 : vector<8x128xf32>
    %268 = vector.extract_strided_slice %261 {offsets = [0, 128], sizes = [8, 128], strides = [1, 1]} : vector<8x384xf32> to vector<8x128xf32>
    %269 = vector.extract_strided_slice %263 {offsets = [0, 128], sizes = [8, 128], strides = [1, 1]} : vector<8x640xf32> to vector<8x128xf32>
    %270 = arith.addf %268, %269 : vector<8x128xf32>
    %271 = math.tanh %270 : vector<8x128xf32>
    %272 = vector.extract_strided_slice %261 {offsets = [0, 256], sizes = [8, 128], strides = [1, 1]} : vector<8x384xf32> to vector<8x128xf32>
    %273 = vector.extract_strided_slice %263 {offsets = [0, 256], sizes = [8, 128], strides = [1, 1]} : vector<8x640xf32> to vector<8x128xf32>
    %274 = arith.addf %272, %273 : vector<8x128xf32>
    %275 = math.tanh %274 : vector<8x128xf32>
    %cst_61 = arith.constant 1.000000e+00 : f32
    %276 = vector.broadcast %cst_61 : f32 to vector<8x128xf32>
    %277 = arith.subf %276, %267 : vector<8x128xf32>
    %278 = arith.mulf %267, %277 : vector<8x128xf32>
    %cst_62 = arith.constant 1.000000e+00 : f32
    %279 = vector.broadcast %cst_62 : f32 to vector<8x128xf32>
    %280 = arith.subf %279, %271 : vector<8x128xf32>
    %281 = arith.mulf %271, %280 : vector<8x128xf32>
    %cst_63 = arith.constant 1.000000e+00 : f32
    %282 = vector.broadcast %cst_63 : f32 to vector<8x128xf32>
    %283 = arith.subf %282, %275 : vector<8x128xf32>
    %284 = arith.mulf %275, %283 : vector<8x128xf32>
    %285 = arith.mulf %281, %284 : vector<8x128xf32>
    %286 = arith.mulf %278, %285 : vector<8x128xf32>
    %287 = arith.truncf %286 : vector<8x128xf32> to vector<8x128xbf16>
    %cst_64 = arith.constant dense<0.000000e+00> : vector<8x256xf32>
    %288 = tpu.matmul %287, %4, %cst_64 {dimension_numbers = #tpu.dot_dimension_numbers<[1], [0], [0], [1], [0, 0, 1, 1], [], []>} : vector<8x128xbf16>, vector<128x256xbf16>, vector<8x256xf32> -> vector<8x256xf32>
    %289 = arith.addf %288, %7 : vector<8x256xf32>
    %290 = vector.extract_strided_slice %289 {offsets = [0, 0], sizes = [8, 128], strides = [1, 1]} : vector<8x256xf32> to vector<8x128xf32>
    %291 = vector.extract_strided_slice %263 {offsets = [0, 384], sizes = [8, 128], strides = [1, 1]} : vector<8x640xf32> to vector<8x128xf32>
    %292 = arith.addf %290, %291 : vector<8x128xf32>
    %293 = arith.negf %292 : vector<8x128xf32>
    %294 = math.exp %293 : vector<8x128xf32>
    %cst_65 = arith.constant 1.000000e+00 : f32
    %295 = vector.broadcast %cst_65 : f32 to vector<8x128xf32>
    %296 = arith.addf %295, %294 : vector<8x128xf32>
    %297 = arith.divf %295, %296 : vector<8x128xf32>
    %298 = vector.extract_strided_slice %289 {offsets = [0, 128], sizes = [8, 128], strides = [1, 1]} : vector<8x256xf32> to vector<8x128xf32>
    %299 = vector.extract_strided_slice %263 {offsets = [0, 512], sizes = [8, 128], strides = [1, 1]} : vector<8x640xf32> to vector<8x128xf32>
    %300 = arith.addf %298, %299 : vector<8x128xf32>
    %301 = math.tanh %300 : vector<8x128xf32>
    %302 = arith.subf %254, %301 : vector<8x128xf32>
    %303 = arith.mulf %297, %302 : vector<8x128xf32>
    %304 = arith.addf %301, %303 : vector<8x128xf32>
    %305 = arith.index_cast %c5_i32 : i32 to index
    %c0_66 = arith.constant 0 : index
    %c0_67 = arith.constant 0 : index
    %306 = vector.load %arg6[%305, %c0_66, %c0_67] : memref<8x8x128xf32, #tpu.memory_space<vmem>>, vector<1x8x128xf32>
    %307 = vector.shape_cast %306 : vector<1x8x128xf32> to vector<8x128xf32>
    %308 = vector.shape_cast %304 : vector<8x128xf32> to vector<1x8x128xf32>
    tpu.vector_store %arg6[%305, %c0_66, %c0_67], %308 {strides = array<i32>} : memref<8x8x128xf32, #tpu.memory_space<vmem>>, vector<1x8x128xf32>,
    %c6_i32 = arith.constant 6 : i32
    %309 = arith.index_cast %c6_i32 : i32 to index
    %c0_68 = arith.constant 0 : index
    %c0_69 = arith.constant 0 : index
    %310 = vector.load %arg2[%309, %c0_68, %c0_69] : memref<8x8x384xf32, #tpu.memory_space<vmem>>, vector<1x8x384xf32>
    %311 = vector.shape_cast %310 : vector<1x8x384xf32> to vector<8x384xf32>
    %312 = arith.truncf %304 : vector<8x128xf32> to vector<8x128xbf16>
    %cst_70 = arith.constant dense<0.000000e+00> : vector<8x640xf32>
    %313 = tpu.matmul %312, %3, %cst_70 {dimension_numbers = #tpu.dot_dimension_numbers<[1], [0], [0], [1], [0, 0, 1, 1], [], []>} : vector<8x128xbf16>, vector<128x640xbf16>, vector<8x640xf32> -> vector<8x640xf32>
    %314 = vector.extract_strided_slice %311 {offsets = [0, 0], sizes = [8, 128], strides = [1, 1]} : vector<8x384xf32> to vector<8x128xf32>
    %315 = vector.extract_strided_slice %313 {offsets = [0, 0], sizes = [8, 128], strides = [1, 1]} : vector<8x640xf32> to vector<8x128xf32>
    %316 = arith.addf %314, %315 : vector<8x128xf32>
    %317 = math.tanh %316 : vector<8x128xf32>
    %318 = vector.extract_strided_slice %311 {offsets = [0, 128], sizes = [8, 128], strides = [1, 1]} : vector<8x384xf32> to vector<8x128xf32>
    %319 = vector.extract_strided_slice %313 {offsets = [0, 128], sizes = [8, 128], strides = [1, 1]} : vector<8x640xf32> to vector<8x128xf32>
    %320 = arith.addf %318, %319 : vector<8x128xf32>
    %321 = math.tanh %320 : vector<8x128xf32>
    %322 = vector.extract_strided_slice %311 {offsets = [0, 256], sizes = [8, 128], strides = [1, 1]} : vector<8x384xf32> to vector<8x128xf32>
    %323 = vector.extract_strided_slice %313 {offsets = [0, 256], sizes = [8, 128], strides = [1, 1]} : vector<8x640xf32> to vector<8x128xf32>
    %324 = arith.addf %322, %323 : vector<8x128xf32>
    %325 = math.tanh %324 : vector<8x128xf32>
    %cst_71 = arith.constant 1.000000e+00 : f32
    %326 = vector.broadcast %cst_71 : f32 to vector<8x128xf32>
    %327 = arith.subf %326, %317 : vector<8x128xf32>
    %328 = arith.mulf %317, %327 : vector<8x128xf32>
    %cst_72 = arith.constant 1.000000e+00 : f32
    %329 = vector.broadcast %cst_72 : f32 to vector<8x128xf32>
    %330 = arith.subf %329, %321 : vector<8x128xf32>
    %331 = arith.mulf %321, %330 : vector<8x128xf32>
    %cst_73 = arith.constant 1.000000e+00 : f32
    %332 = vector.broadcast %cst_73 : f32 to vector<8x128xf32>
    %333 = arith.subf %332, %325 : vector<8x128xf32>
    %334 = arith.mulf %325, %333 : vector<8x128xf32>
    %335 = arith.mulf %331, %334 : vector<8x128xf32>
    %336 = arith.mulf %328, %335 : vector<8x128xf32>
    %337 = arith.truncf %336 : vector<8x128xf32> to vector<8x128xbf16>
    %cst_74 = arith.constant dense<0.000000e+00> : vector<8x256xf32>
    %338 = tpu.matmul %337, %4, %cst_74 {dimension_numbers = #tpu.dot_dimension_numbers<[1], [0], [0], [1], [0, 0, 1, 1], [], []>} : vector<8x128xbf16>, vector<128x256xbf16>, vector<8x256xf32> -> vector<8x256xf32>
    %339 = arith.addf %338, %7 : vector<8x256xf32>
    %340 = vector.extract_strided_slice %339 {offsets = [0, 0], sizes = [8, 128], strides = [1, 1]} : vector<8x256xf32> to vector<8x128xf32>
    %341 = vector.extract_strided_slice %313 {offsets = [0, 384], sizes = [8, 128], strides = [1, 1]} : vector<8x640xf32> to vector<8x128xf32>
    %342 = arith.addf %340, %341 : vector<8x128xf32>
    %343 = arith.negf %342 : vector<8x128xf32>
    %344 = math.exp %343 : vector<8x128xf32>
    %cst_75 = arith.constant 1.000000e+00 : f32
    %345 = vector.broadcast %cst_75 : f32 to vector<8x128xf32>
    %346 = arith.addf %345, %344 : vector<8x128xf32>
    %347 = arith.divf %345, %346 : vector<8x128xf32>
    %348 = vector.extract_strided_slice %339 {offsets = [0, 128], sizes = [8, 128], strides = [1, 1]} : vector<8x256xf32> to vector<8x128xf32>
    %349 = vector.extract_strided_slice %313 {offsets = [0, 512], sizes = [8, 128], strides = [1, 1]} : vector<8x640xf32> to vector<8x128xf32>
    %350 = arith.addf %348, %349 : vector<8x128xf32>
    %351 = math.tanh %350 : vector<8x128xf32>
    %352 = arith.subf %304, %351 : vector<8x128xf32>
    %353 = arith.mulf %347, %352 : vector<8x128xf32>
    %354 = arith.addf %351, %353 : vector<8x128xf32>
    %355 = arith.index_cast %c6_i32 : i32 to index
    %c0_76 = arith.constant 0 : index
    %c0_77 = arith.constant 0 : index
    %356 = vector.load %arg6[%355, %c0_76, %c0_77] : memref<8x8x128xf32, #tpu.memory_space<vmem>>, vector<1x8x128xf32>
    %357 = vector.shape_cast %356 : vector<1x8x128xf32> to vector<8x128xf32>
    %358 = vector.shape_cast %354 : vector<8x128xf32> to vector<1x8x128xf32>
    tpu.vector_store %arg6[%355, %c0_76, %c0_77], %358 {strides = array<i32>} : memref<8x8x128xf32, #tpu.memory_space<vmem>>, vector<1x8x128xf32>,
    %c7_i32 = arith.constant 7 : i32
    %359 = arith.index_cast %c7_i32 : i32 to index
    %c0_78 = arith.constant 0 : index
    %c0_79 = arith.constant 0 : index
    %360 = vector.load %arg2[%359, %c0_78, %c0_79] : memref<8x8x384xf32, #tpu.memory_space<vmem>>, vector<1x8x384xf32>
    %361 = vector.shape_cast %360 : vector<1x8x384xf32> to vector<8x384xf32>
    %362 = arith.truncf %354 : vector<8x128xf32> to vector<8x128xbf16>
    %cst_80 = arith.constant dense<0.000000e+00> : vector<8x640xf32>
    %363 = tpu.matmul %362, %3, %cst_80 {dimension_numbers = #tpu.dot_dimension_numbers<[1], [0], [0], [1], [0, 0, 1, 1], [], []>} : vector<8x128xbf16>, vector<128x640xbf16>, vector<8x640xf32> -> vector<8x640xf32>
    %364 = vector.extract_strided_slice %361 {offsets = [0, 0], sizes = [8, 128], strides = [1, 1]} : vector<8x384xf32> to vector<8x128xf32>
    %365 = vector.extract_strided_slice %363 {offsets = [0, 0], sizes = [8, 128], strides = [1, 1]} : vector<8x640xf32> to vector<8x128xf32>
    %366 = arith.addf %364, %365 : vector<8x128xf32>
    %367 = math.tanh %366 : vector<8x128xf32>
    %368 = vector.extract_strided_slice %361 {offsets = [0, 128], sizes = [8, 128], strides = [1, 1]} : vector<8x384xf32> to vector<8x128xf32>
    %369 = vector.extract_strided_slice %363 {offsets = [0, 128], sizes = [8, 128], strides = [1, 1]} : vector<8x640xf32> to vector<8x128xf32>
    %370 = arith.addf %368, %369 : vector<8x128xf32>
    %371 = math.tanh %370 : vector<8x128xf32>
    %372 = vector.extract_strided_slice %361 {offsets = [0, 256], sizes = [8, 128], strides = [1, 1]} : vector<8x384xf32> to vector<8x128xf32>
    %373 = vector.extract_strided_slice %363 {offsets = [0, 256], sizes = [8, 128], strides = [1, 1]} : vector<8x640xf32> to vector<8x128xf32>
    %374 = arith.addf %372, %373 : vector<8x128xf32>
    %375 = math.tanh %374 : vector<8x128xf32>
    %cst_81 = arith.constant 1.000000e+00 : f32
    %376 = vector.broadcast %cst_81 : f32 to vector<8x128xf32>
    %377 = arith.subf %376, %367 : vector<8x128xf32>
    %378 = arith.mulf %367, %377 : vector<8x128xf32>
    %cst_82 = arith.constant 1.000000e+00 : f32
    %379 = vector.broadcast %cst_82 : f32 to vector<8x128xf32>
    %380 = arith.subf %379, %371 : vector<8x128xf32>
    %381 = arith.mulf %371, %380 : vector<8x128xf32>
    %cst_83 = arith.constant 1.000000e+00 : f32
    %382 = vector.broadcast %cst_83 : f32 to vector<8x128xf32>
    %383 = arith.subf %382, %375 : vector<8x128xf32>
    %384 = arith.mulf %375, %383 : vector<8x128xf32>
    %385 = arith.mulf %381, %384 : vector<8x128xf32>
    %386 = arith.mulf %378, %385 : vector<8x128xf32>
    %387 = arith.truncf %386 : vector<8x128xf32> to vector<8x128xbf16>
    %cst_84 = arith.constant dense<0.000000e+00> : vector<8x256xf32>
    %388 = tpu.matmul %387, %4, %cst_84 {dimension_numbers = #tpu.dot_dimension_numbers<[1], [0], [0], [1], [0, 0, 1, 1], [], []>} : vector<8x128xbf16>, vector<128x256xbf16>, vector<8x256xf32> -> vector<8x256xf32>
    %389 = arith.addf %388, %7 : vector<8x256xf32>
    %390 = vector.extract_strided_slice %389 {offsets = [0, 0], sizes = [8, 128], strides = [1, 1]} : vector<8x256xf32> to vector<8x128xf32>
    %391 = vector.extract_strided_slice %363 {offsets = [0, 384], sizes = [8, 128], strides = [1, 1]} : vector<8x640xf32> to vector<8x128xf32>
    %392 = arith.addf %390, %391 : vector<8x128xf32>
    %393 = arith.negf %392 : vector<8x128xf32>
    %394 = math.exp %393 : vector<8x128xf32>
    %cst_85 = arith.constant 1.000000e+00 : f32
    %395 = vector.broadcast %cst_85 : f32 to vector<8x128xf32>
    %396 = arith.addf %395, %394 : vector<8x128xf32>
    %397 = arith.divf %395, %396 : vector<8x128xf32>
    %398 = vector.extract_strided_slice %389 {offsets = [0, 128], sizes = [8, 128], strides = [1, 1]} : vector<8x256xf32> to vector<8x128xf32>
    %399 = vector.extract_strided_slice %363 {offsets = [0, 512], sizes = [8, 128], strides = [1, 1]} : vector<8x640xf32> to vector<8x128xf32>
    %400 = arith.addf %398, %399 : vector<8x128xf32>
    %401 = math.tanh %400 : vector<8x128xf32>
    %402 = arith.subf %354, %401 : vector<8x128xf32>
    %403 = arith.mulf %397, %402 : vector<8x128xf32>
    %404 = arith.addf %401, %403 : vector<8x128xf32>
    %405 = arith.index_cast %c7_i32 : i32 to index
    %c0_86 = arith.constant 0 : index
    %c0_87 = arith.constant 0 : index
    %406 = vector.load %arg6[%405, %c0_86, %c0_87] : memref<8x8x128xf32, #tpu.memory_space<vmem>>, vector<1x8x128xf32>
    %407 = vector.shape_cast %406 : vector<1x8x128xf32> to vector<8x128xf32>
    %408 = vector.shape_cast %404 : vector<8x128xf32> to vector<1x8x128xf32>
    tpu.vector_store %arg6[%405, %c0_86, %c0_87], %408 {strides = array<i32>} : memref<8x8x128xf32, #tpu.memory_space<vmem>>, vector<1x8x128xf32>,
    %c8_i32 = arith.constant 8 : i32
    %c0_88 = arith.constant 0 : index
    %c0_89 = arith.constant 0 : index
    %409 = vector.load %arg7[%c0_88, %c0_89] : memref<8x128xf32, #tpu.memory_space<vmem>>, vector<8x128xf32>
    tpu.vector_store %arg7[%c0_88, %c0_89], %404 {strides = array<i32>} : memref<8x128xf32, #tpu.memory_space<vmem>>, vector<8x128xf32>,
    return
  }
  func.func @transform_0(%arg0: i32, %arg1: i32) -> (i32, i32, i32) {
    %c0_i32 = arith.constant 0 : i32
    %c0_i32_0 = arith.constant 0 : i32
    return %arg1, %arg0, %c0_i32 : i32, i32, i32
  }
  func.func @transform_1(%arg0: i32, %arg1: i32) -> (i32, i32) {
    %c0_i32 = arith.constant 0 : i32
    %c0_i32_0 = arith.constant 0 : i32
    %c0_i32_1 = arith.constant 0 : i32
    return %c0_i32, %c0_i32_0 : i32, i32
  }
  func.func @transform_2(%arg0: i32, %arg1: i32) -> (i32, i32) {
    %c0_i32 = arith.constant 0 : i32
    %c0_i32_0 = arith.constant 0 : i32
    %c0_i32_1 = arith.constant 0 : i32
    return %c0_i32, %c0_i32_0 : i32, i32
  }
  func.func @transform_3(%arg0: i32, %arg1: i32) -> (i32, i32) {
    %c0_i32 = arith.constant 0 : i32
    %c0_i32_0 = arith.constant 0 : i32
    %c0_i32_1 = arith.constant 0 : i32
    return %c0_i32, %c0_i32_0 : i32, i32
  }
  func.func @transform_4(%arg0: i32, %arg1: i32) -> (i32, i32, i32) {
    %c0_i32 = arith.constant 0 : i32
    %c0_i32_0 = arith.constant 0 : i32
    return %arg1, %arg0, %c0_i32 : i32, i32, i32
  }
}

</mosaic_0001>

<llo_original>
// kernel: net_forward.1
$region0: #{net_forward.1}
  #allocation0 [shape = 'u32[]', space=smem, size = 0x4, offset = 0x4, fixed_abs, tag = 'smem constant byte address 0x4 - core index']
  #allocation1 [shape = 'u32[144,128]{1,0:T(1,128)}', space=vmem, size = 0x12000, scoped, tag = 'internal scratch']
  #allocation2 [shape = 'f32[8,128]{1,0:T(8,128)}', space=vmem, size = 0x1000, scoped, tag = 'scratch operand']
  %s0 = inlined_call_operand.vmem [shape: f32[8,8,384], index: 0, kind: input, shape index: {}]
  %s1 = inlined_call_operand.vmem [shape: bf16[128,640], index: 1, kind: input, shape index: {}]
  %s2 = inlined_call_operand.vmem [shape: bf16[128,256], index: 2, kind: input, shape index: {}]
  %s3 = inlined_call_operand.vmem [shape: f32[1,256], index: 3, kind: input, shape index: {}]
  %s4 = inlined_call_operand.vmem [shape: f32[8,8,128], index: 4, kind: output, shape index: {}]
  %s5 = sld [smem:[#allocation0]]
  $region30: #{net_forward.1} parent=0
    _
  %s7 = ssub.s32 1, %s5
  %s8 = scalar_select 0, %s7, %s5
  // Predicated region
  $region2: #{net_forward.1} parent=0 // pred_check
    _
  $region3: #{net_forward.1} parent=0 // pred_check_branch
    %10 = sbr.rel (0) target = $region5
  $region4: #{net_forward.1} parent=0 // pred_region
    _
  $region5: #{net_forward.1} parent=0 // pred_fallthru
    _
  // Predicated region
  $region6: #{net_forward.1} parent=0 // pred_check
    _
  $region7: #{net_forward.1} parent=0 // pred_check_branch
    %12 = sbr.rel (0) target = $region9
  $region8: #{net_forward.1} parent=0 // pred_region
    _
  $region9: #{net_forward.1} parent=0 // pred_fallthru
    _
  // Predicated region
  $region10: #{net_forward.1} parent=0 // pred_check
    _
  $region11: #{net_forward.1} parent=0 // pred_check_branch
    %14 = sbr.rel (0) target = $region13
  $region12: #{net_forward.1} parent=0 // pred_region
    _
  $region13: #{net_forward.1} parent=0 // pred_fallthru
    _
  // Predicated region
  $region14: #{net_forward.1} parent=0 // pred_check
    _
  $region15: #{net_forward.1} parent=0 // pred_check_branch
    %16 = sbr.rel (0) target = $region17
  $region16: #{net_forward.1} parent=0 // pred_region
    _
  $region17: #{net_forward.1} parent=0 // pred_fallthru
    _
  %p18 = scmp.eq.s32.totalorder 0, 0
  // Predicated region
  $region18: #{net_forward.1} parent=0 // pred_check
    %p19 = pneg %p18
  $region19: #{net_forward.1} parent=0 // pred_check_branch
    %21 = sbr.rel (%p19) target = $region21
  $region20: #{net_forward.1} parent=0 // pred_region
    %22 = vst [vmem:[#allocation2] sm:$0xff] 0.0
  $region21: #{net_forward.1} parent=0 // pred_fallthru
    _
  %v23 = vld [vmem:[%s1] sm:$0xff]
  %v24 = vld [vmem:[%s1 + $0x8] sm:$0xff]
  %v25 = vld [vmem:[%s1 + $0x10] sm:$0xf]
  %v26 = vld [vmem:[%s1 + $0x14] sm:$0xff]
  %v27 = vld [vmem:[%s1 + $0x1c] sm:$0xff]
  %v28 = vld [vmem:[%s1 + $0x24] sm:$0xf]
  %v29 = vld [vmem:[%s1 + $0x28] sm:$0xff]
  %v30 = vld [vmem:[%s1 + $0x30] sm:$0xff]
  %v31 = vld [vmem:[%s1 + $0x38] sm:$0xf]
  %v32 = vld [vmem:[%s1 + $0x3c] sm:$0xff]
  %v33 = vld [vmem:[%s1 + $0x44] sm:$0xff]
  %v34 = vld [vmem:[%s1 + $0x4c] sm:$0xf]
  %v35 = vld [vmem:[%s1 + $0x50] sm:$0xff]
  %v36 = vld [vmem:[%s1 + $0x58] sm:$0xff]
  %v37 = vld [vmem:[%s1 + $0x60] sm:$0xf]
  %v38 = vld [vmem:[%s1 + $0x64] sm:$0xff]
  %v39 = vld [vmem:[%s1 + $0x6c] sm:$0xff]
  %v40 = vld [vmem:[%s1 + $0x74] sm:$0xf]
  %v41 = vld [vmem:[%s1 + $0x78] sm:$0xff]
  %v42 = vld [vmem:[%s1 + $0x80] sm:$0xff]
  %v43 = vld [vmem:[%s1 + $0x88] sm:$0xf]
  %v44 = vld [vmem:[%s1 + $0x8c] sm:$0xff]
  %v45 = vld [vmem:[%s1 + $0x94] sm:$0xff]
  %v46 = vld [vmem:[%s1 + $0x9c] sm:$0xf]
  %v47 = vld [vmem:[%s1 + $0xa0] sm:$0xff]
  %v48 = vld [vmem:[%s1 + $0xa8] sm:$0xff]
  %v49 = vld [vmem:[%s1 + $0xb0] sm:$0xf]
  %v50 = vld [vmem:[%s1 + $0xb4] sm:$0xff]
  %v51 = vld [vmem:[%s1 + $0xbc] sm:$0xff]
  %v52 = vld [vmem:[%s1 + $0xc4] sm:$0xf]
  %v53 = vld [vmem:[%s1 + $0xc8] sm:$0xff]
  %v54 = vld [vmem:[%s1 + $0xd0] sm:$0xff]
  %v55 = vld [vmem:[%s1 + $0xd8] sm:$0xf]
  %v56 = vld [vmem:[%s1 + $0xdc] sm:$0xff]
  %v57 = vld [vmem:[%s1 + $0xe4] sm:$0xff]
  %v58 = vld [vmem:[%s1 + $0xec] sm:$0xf]
  %v59 = vld [vmem:[%s1 + $0xf0] sm:$0xff]
  %v60 = vld [vmem:[%s1 + $0xf8] sm:$0xff]
  %v61 = vld [vmem:[%s1 + $0x100] sm:$0xf]
  %v62 = vld [vmem:[%s1 + $0x104] sm:$0xff]
  %v63 = vld [vmem:[%s1 + $0x10c] sm:$0xff]
  %v64 = vld [vmem:[%s1 + $0x114] sm:$0xf]
  %v65 = vld [vmem:[%s1 + $0x118] sm:$0xff]
  %v66 = vld [vmem:[%s1 + $0x120] sm:$0xff]
  %v67 = vld [vmem:[%s1 + $0x128] sm:$0xf]
  %v68 = vld [vmem:[%s1 + $0x12c] sm:$0xff]
  %v69 = vld [vmem:[%s1 + $0x134] sm:$0xff]
  %v70 = vld [vmem:[%s1 + $0x13c] sm:$0xf]
  %v71 = vld [vmem:[%s2] sm:$0xff]
  %v72 = vld [vmem:[%s2 + $0x8] sm:$0xff]
  %v73 = vld [vmem:[%s2 + $0x10] sm:$0xff]
  %v74 = vld [vmem:[%s2 + $0x18] sm:$0xff]
  %v75 = vld [vmem:[%s2 + $0x20] sm:$0xff]
  %v76 = vld [vmem:[%s2 + $0x28] sm:$0xff]
  %v77 = vld [vmem:[%s2 + $0x30] sm:$0xff]
  %v78 = vld [vmem:[%s2 + $0x38] sm:$0xff]
  %v79 = vld [vmem:[%s2 + $0x40] sm:$0xff]
  %v80 = vld [vmem:[%s2 + $0x48] sm:$0xff]
  %v81 = vld [vmem:[%s2 + $0x50] sm:$0xff]
  %v82 = vld [vmem:[%s2 + $0x58] sm:$0xff]
  %v83 = vld [vmem:[%s2 + $0x60] sm:$0xff]
  %v84 = vld [vmem:[%s2 + $0x68] sm:$0xff]
  %v85 = vld [vmem:[%s2 + $0x70] sm:$0xff]
  %v86 = vld [vmem:[%s2 + $0x78] sm:$0xff]
  %v87 = vld [vmem:[%s3] sm:$0x3]
  %v89 = vlaneseq
  %v90 = vshrl.u32 %v89, 7
  %v91 = vsub.s32 0, %v90
  %v92 = vrot.slane %v87, %v91
  %v93 = vlaneseq
  %v94 = vshrl.u32 %v93, 7
  %v95 = vsub.s32 1, %v94
  %v96 = vrot.slane %v87, %v95
  %v99 = vld [vmem:[#allocation2] sm:$0xff]
  %v100 = vld [vmem:[%s0] sm:$0xff]
  %v101 = vld [vmem:[%s0 + $0x8] sm:$0xff]
  %v102 = vld [vmem:[%s0 + $0x10] sm:$0xff]
  %v103 = vpack.c.bf16 %v99, %v99
  %v152 = vunpack.c.l.b16 %v23
  %v153 = vunpack.c.h.b16 %v23
  %v154 = vunpack.c.l.b16 %v24
  %v155 = vunpack.c.h.b16 %v24
  %v156 = vunpack.c.l.b16 %v25
  %v157 = vunpack.c.l.b16 %v26
  %v158 = vunpack.c.h.b16 %v26
  %v159 = vunpack.c.l.b16 %v27
  %v160 = vunpack.c.h.b16 %v27
  %v161 = vunpack.c.l.b16 %v28
  %v162 = vunpack.c.l.b16 %v29
  %v163 = vunpack.c.h.b16 %v29
  %v164 = vunpack.c.l.b16 %v30
  %v165 = vunpack.c.h.b16 %v30
  %v166 = vunpack.c.l.b16 %v31
  %v167 = vunpack.c.l.b16 %v32
  %v168 = vunpack.c.h.b16 %v32
  %v169 = vunpack.c.l.b16 %v33
  %v170 = vunpack.c.h.b16 %v33
  %v171 = vunpack.c.l.b16 %v34
  %v172 = vunpack.c.l.b16 %v35
  %v173 = vunpack.c.h.b16 %v35
  %v174 = vunpack.c.l.b16 %v36
  %v175 = vunpack.c.h.b16 %v36
  %v176 = vunpack.c.l.b16 %v37
  %v177 = vunpack.c.l.b16 %v38
  %v178 = vunpack.c.h.b16 %v38
  %v179 = vunpack.c.l.b16 %v39
  %v180 = vunpack.c.h.b16 %v39
  %v181 = vunpack.c.l.b16 %v40
  %v182 = vunpack.c.l.b16 %v41
  %v183 = vunpack.c.h.b16 %v41
  %v184 = vunpack.c.l.b16 %v42
  %v185 = vunpack.c.h.b16 %v42
  %v186 = vunpack.c.l.b16 %v43
  %v187 = vunpack.c.l.b16 %v44
  %v188 = vunpack.c.h.b16 %v44
  %v189 = vunpack.c.l.b16 %v45
  %v190 = vunpack.c.h.b16 %v45
  %v191 = vunpack.c.l.b16 %v46
  %v192 = vunpack.c.l.b16 %v47
  %v193 = vunpack.c.h.b16 %v47
  %v194 = vunpack.c.l.b16 %v48
  %v195 = vunpack.c.h.b16 %v48
  %v196 = vunpack.c.l.b16 %v49
  %v197 = vunpack.c.l.b16 %v50
  %v198 = vunpack.c.h.b16 %v50
  %v199 = vunpack.c.l.b16 %v51
  %v200 = vunpack.c.h.b16 %v51
  %v201 = vunpack.c.l.b16 %v52
  %v202 = vunpack.c.l.b16 %v53
  %v203 = vunpack.c.h.b16 %v53
  %v204 = vunpack.c.l.b16 %v54
  %v205 = vunpack.c.h.b16 %v54
  %v206 = vunpack.c.l.b16 %v55
  %v207 = vunpack.c.l.b16 %v56
  %v208 = vunpack.c.h.b16 %v56
  %v209 = vunpack.c.l.b16 %v57
  %v210 = vunpack.c.h.b16 %v57
  %v211 = vunpack.c.l.b16 %v58
  %v212 = vunpack.c.l.b16 %v59
  %v213 = vunpack.c.h.b16 %v59
  %v214 = vunpack.c.l.b16 %v60
  %v215 = vunpack.c.h.b16 %v60
  %v216 = vunpack.c.l.b16 %v61
  %v217 = vunpack.c.l.b16 %v62
  %v218 = vunpack.c.h.b16 %v62
  %v219 = vunpack.c.l.b16 %v63
  %v220 = vunpack.c.h.b16 %v63
  %v221 = vunpack.c.l.b16 %v64
  %v222 = vunpack.c.l.b16 %v65
  %v223 = vunpack.c.h.b16 %v65
  %v224 = vunpack.c.l.b16 %v66
  %v225 = vunpack.c.h.b16 %v66
  %v226 = vunpack.c.l.b16 %v67
  %v227 = vunpack.c.l.b16 %v68
  %v228 = vunpack.c.h.b16 %v68
  %v229 = vunpack.c.l.b16 %v69
  %v230 = vunpack.c.h.b16 %v69
  %v231 = vunpack.c.l.b16 %v70
  %v232 = vpack.c.b16 %v157, %v152
  %v233 = vpack.c.b16 %v158, %v153
  %v234 = vpack.c.b16 %v159, %v154
  %v235 = vpack.c.b16 %v160, %v155
  %v236 = vpack.c.b16 %v161, %v156
  %v237 = vpack.c.b16 %v167, %v162
  %v238 = vpack.c.b16 %v168, %v163
  %v239 = vpack.c.b16 %v169, %v164
  %v240 = vpack.c.b16 %v170, %v165
  %v241 = vpack.c.b16 %v171, %v166
  %v242 = vpack.c.b16 %v177, %v172
  %v243 = vpack.c.b16 %v178, %v173
  %v244 = vpack.c.b16 %v179, %v174
  %v245 = vpack.c.b16 %v180, %v175
  %v246 = vpack.c.b16 %v181, %v176
  %v247 = vpack.c.b16 %v187, %v182
  %v248 = vpack.c.b16 %v188, %v183
  %v249 = vpack.c.b16 %v189, %v184
  %v250 = vpack.c.b16 %v190, %v185
  %v251 = vpack.c.b16 %v191, %v186
  %v252 = vpack.c.b16 %v197, %v192
  %v253 = vpack.c.b16 %v198, %v193
  %v254 = vpack.c.b16 %v199, %v194
  %v255 = vpack.c.b16 %v200, %v195
  %v256 = vpack.c.b16 %v201, %v196
  %v257 = vpack.c.b16 %v207, %v202
  %v258 = vpack.c.b16 %v208, %v203
  %v259 = vpack.c.b16 %v209, %v204
  %v260 = vpack.c.b16 %v210, %v205
  %v261 = vpack.c.b16 %v211, %v206
  %v262 = vpack.c.b16 %v217, %v212
  %v263 = vpack.c.b16 %v218, %v213
  %v264 = vpack.c.b16 %v219, %v214
  %v265 = vpack.c.b16 %v220, %v215
  %v266 = vpack.c.b16 %v221, %v216
  %v267 = vpack.c.b16 %v227, %v222
  %v268 = vpack.c.b16 %v228, %v223
  %v269 = vpack.c.b16 %v229, %v224
  %v270 = vpack.c.b16 %v230, %v225
  %v271 = vpack.c.b16 %v231, %v226
  %312 = vmatprep.subr.bf16.mxu0 %v268
  %313 = vmatpush1.bf16.msra.mxu0 %v267
  %314 = vmatprep.subr.bf16.mxu0 %v263
  %315 = vmatpush1.bf16.msra.mxu0 %v262
  %316 = vmatprep.subr.bf16.mxu0 %v258
  %317 = vmatpush1.bf16.msra.mxu0 %v257
  %318 = vmatprep.subr.bf16.mxu0 %v253
  %319 = vmatpush1.bf16.msra.mxu0 %v252
  %320 = vmatprep.subr.bf16.mxu0 %v248
  %321 = vmatpush1.bf16.msra.mxu0 %v247
  %322 = vmatprep.subr.bf16.mxu0 %v243
  %323 = vmatpush1.bf16.msra.mxu0 %v242
  %324 = vmatprep.subr.bf16.mxu0 %v238
  %325 = vmatpush1.bf16.msra.mxu0 %v237
  %326 = vmatprep.subr.bf16.mxu0 %v233
  %327 = vmatpush1.bf16.msra.mxu0 %v232
  %328 = vmatprep.subr.bf16.mxu0 0
  %329 = vmatpush2.bf16.msra.mxu0 0
  %330 = vmatprep.subr.bf16.mxu0 0
  %331 = vmatpush2.bf16.msra.mxu0 0
  %332 = vmatprep.subr.bf16.mxu0 0
  %333 = vmatpush2.bf16.msra.mxu0 0
  %334 = vmatprep.subr.bf16.mxu0 0
  %335 = vmatpush2.bf16.msra.mxu0 0
  %336 = vmatprep.subr.bf16.mxu0 0
  %337 = vmatpush2.bf16.msra.mxu0 0
  %338 = vmatprep.subr.bf16.mxu0 0
  %339 = vmatpush2.bf16.msra.mxu0 0
  %340 = vmatprep.subr.bf16.mxu0 0
  %341 = vmatpush2.bf16.msra.mxu0 0
  %342 = vmatprep.subr.bf16.mxu0 0
  %343 = vmatpush2.bf16.msra.mxu0 0
  %344 = vmatprep.mubr.bf16.mxu0 0
  %345 = vmatmul.mubr.bf16.gmra.mxu0 %v103
  %v346 = vpop.f32.mrf.mxu0
  %v347 = vadd.f32 0.0, %v346
  %v348 = vpop.f32.mrf.mxu0
  %v349 = vadd.f32 0.0, %v348
  %v350 = vpop.f32.mrf.mxu0
  %v351 = vpop.f32.mrf.mxu0
  %352 = vdwg.mxu0
  %353 = vmatprep.subr.bf16.mxu0 %v270
  %354 = vmatpush1.bf16.msra.mxu0 %v269
  %355 = vmatprep.subr.bf16.mxu0 %v265
  %356 = vmatpush1.bf16.msra.mxu0 %v264
  %357 = vmatprep.subr.bf16.mxu0 %v260
  %358 = vmatpush1.bf16.msra.mxu0 %v259
  %359 = vmatprep.subr.bf16.mxu0 %v255
  %360 = vmatpush1.bf16.msra.mxu0 %v254
  %361 = vmatprep.subr.bf16.mxu0 %v250
  %362 = vmatpush1.bf16.msra.mxu0 %v249
  %363 = vmatprep.subr.bf16.mxu0 %v245
  %364 = vmatpush1.bf16.msra.mxu0 %v244
  %365 = vmatprep.subr.bf16.mxu0 %v240
  %366 = vmatpush1.bf16.msra.mxu0 %v239
  %367 = vmatprep.subr.bf16.mxu0 %v235
  %368 = vmatpush1.bf16.msra.mxu0 %v234
  %369 = vmatprep.subr.bf16.mxu0 0
  %370 = vmatpush2.bf16.msra.mxu0 0
  %371 = vmatprep.subr.bf16.mxu0 0
  %372 = vmatpush2.bf16.msra.mxu0 0
  %373 = vmatprep.subr.bf16.mxu0 0
  %374 = vmatpush2.bf16.msra.mxu0 0
  %375 = vmatprep.subr.bf16.mxu0 0
  %376 = vmatpush2.bf16.msra.mxu0 0
  %377 = vmatprep.subr.bf16.mxu0 0
  %378 = vmatpush2.bf16.msra.mxu0 0
  %379 = vmatprep.subr.bf16.mxu0 0
  %380 = vmatpush2.bf16.msra.mxu0 0
  %381 = vmatprep.subr.bf16.mxu0 0
  %382 = vmatpush2.bf16.msra.mxu0 0
  %383 = vmatprep.subr.bf16.mxu0 0
  %384 = vmatpush2.bf16.msra.mxu0 0
  %385 = vmatprep.mubr.bf16.mxu0 0
  %386 = vmatmul.mubr.bf16.gmra.mxu0 %v103
  %v387 = vpop.f32.mrf.mxu0
  %v388 = vadd.f32 0.0, %v387
  %v389 = vpop.f32.mrf.mxu0
  %v390 = vadd.f32 0.0, %v389
  %v391 = vpop.f32.mrf.mxu0
  %v392 = vpop.f32.mrf.mxu0
  %393 = vdwg.mxu0
  %394 = vmatprep.subr.bf16.mxu0 0
  %395 = vmatpush1.bf16.msra.mxu0 %v271
  %396 = vmatprep.subr.bf16.mxu0 0
  %397 = vmatpush1.bf16.msra.mxu0 %v266
  %398 = vmatprep.subr.bf16.mxu0 0
  %399 = vmatpush1.bf16.msra.mxu0 %v261
  %400 = vmatprep.subr.bf16.mxu0 0
  %401 = vmatpush1.bf16.msra.mxu0 %v256
  %402 = vmatprep.subr.bf16.mxu0 0
  %403 = vmatpush1.bf16.msra.mxu0 %v251
  %404 = vmatprep.subr.bf16.mxu0 0
  %405 = vmatpush1.bf16.msra.mxu0 %v246
  %406 = vmatprep.subr.bf16.mxu0 0
  %407 = vmatpush1.bf16.msra.mxu0 %v241
  %408 = vmatprep.subr.bf16.mxu0 0
  %409 = vmatpush1.bf16.msra.mxu0 %v236
  %410 = vmatprep.subr.bf16.mxu0 0
  %411 = vmatpush2.bf16.msra.mxu0 0
  %412 = vmatprep.subr.bf16.mxu0 0
  %413 = vmatpush2.bf16.msra.mxu0 0
  %414 = vmatprep.subr.bf16.mxu0 0
  %415 = vmatpush2.bf16.msra.mxu0 0
  %416 = vmatprep.subr.bf16.mxu0 0
  %417 = vmatpush2.bf16.msra.mxu0 0
  %418 = vmatprep.subr.bf16.mxu0 0
  %419 = vmatpush2.bf16.msra.mxu0 0
  %420 = vmatprep.subr.bf16.mxu0 0
  %421 = vmatpush2.bf16.msra.mxu0 0
  %422 = vmatprep.subr.bf16.mxu0 0
  %423 = vmatpush2.bf16.msra.mxu0 0
  %424 = vmatprep.subr.bf16.mxu0 0
  %425 = vmatpush2.bf16.msra.mxu0 0
  %426 = vmatprep.mubr.bf16.mxu0 0
  %427 = vmatmul.mubr.bf16.gmra.mxu0 %v103
  %v428 = vpop.f32.mrf.mxu0
  %v429 = vadd.f32 0.0, %v428
  %v430 = vpop.f32.mrf.mxu0
  %v431 = vpop.f32.mrf.mxu0
  %v432 = vpop.f32.mrf.mxu0
  %433 = vdwg.mxu0
  %v434 = vadd.f32 %v100, %v347
  %v435 = vtanh.pop %v434
  %v436 = vadd.f32 %v101, %v349
  %v437 = vtanh.pop %v436
  %v438 = vadd.f32 %v102, %v388
  %v439 = vtanh.pop %v438
  %v440 = vsub.f32 1.0, %v435
  %v441 = vmul.f32 %v435, %v440
  %v442 = vsub.f32 1.0, %v437
  %v443 = vmul.f32 %v437, %v442
  %v444 = vsub.f32 1.0, %v439
  %v445 = vmul.f32 %v439, %v444
  %v446 = vmul.f32 %v443, %v445
  %v447 = vmul.f32 %v441, %v446
  %v448 = vpack.c.bf16 %v447, %v447
  %v465 = vunpack.c.l.b16 %v71
  %v466 = vunpack.c.h.b16 %v71
  %v467 = vunpack.c.l.b16 %v72
  %v468 = vunpack.c.h.b16 %v72
  %v469 = vunpack.c.l.b16 %v73
  %v470 = vunpack.c.h.b16 %v73
  %v471 = vunpack.c.l.b16 %v74
  %v472 = vunpack.c.h.b16 %v74
  %v473 = vunpack.c.l.b16 %v75
  %v474 = vunpack.c.h.b16 %v75
  %v475 = vunpack.c.l.b16 %v76
  %v476 = vunpack.c.h.b16 %v76
  %v477 = vunpack.c.l.b16 %v77
  %v478 = vunpack.c.h.b16 %v77
  %v479 = vunpack.c.l.b16 %v78
  %v480 = vunpack.c.h.b16 %v78
  %v481 = vunpack.c.l.b16 %v79
  %v482 = vunpack.c.h.b16 %v79
  %v483 = vunpack.c.l.b16 %v80
  %v484 = vunpack.c.h.b16 %v80
  %v485 = vunpack.c.l.b16 %v81
  %v486 = vunpack.c.h.b16 %v81
  %v487 = vunpack.c.l.b16 %v82
  %v488 = vunpack.c.h.b16 %v82
  %v489 = vunpack.c.l.b16 %v83
  %v490 = vunpack.c.h.b16 %v83
  %v491 = vunpack.c.l.b16 %v84
  %v492 = vunpack.c.h.b16 %v84
  %v493 = vunpack.c.l.b16 %v85
  %v494 = vunpack.c.h.b16 %v85
  %v495 = vunpack.c.l.b16 %v86
  %v496 = vunpack.c.h.b16 %v86
  %v497 = vpack.c.b16 %v467, %v465
  %v498 = vpack.c.b16 %v468, %v466
  %v499 = vpack.c.b16 %v471, %v469
  %v500 = vpack.c.b16 %v472, %v470
  %v501 = vpack.c.b16 %v475, %v473
  %v502 = vpack.c.b16 %v476, %v474
  %v503 = vpack.c.b16 %v479, %v477
  %v504 = vpack.c.b16 %v480, %v478
  %v505 = vpack.c.b16 %v483, %v481
  %v506 = vpack.c.b16 %v484, %v482
  %v507 = vpack.c.b16 %v487, %v485
  %v508 = vpack.c.b16 %v488, %v486
  %v509 = vpack.c.b16 %v491, %v489
  %v510 = vpack.c.b16 %v492, %v490
  %v511 = vpack.c.b16 %v495, %v493
  %v512 = vpack.c.b16 %v496, %v494
  %529 = vmatprep.subr.bf16.mxu0 %v512
  %530 = vmatpush1.bf16.msra.mxu0 %v511
  %531 = vmatprep.subr.bf16.mxu0 %v510
  %532 = vmatpush1.bf16.msra.mxu0 %v509
  %533 = vmatprep.subr.bf16.mxu0 %v508
  %534 = vmatpush1.bf16.msra.mxu0 %v507
  %535 = vmatprep.subr.bf16.mxu0 %v506
  %536 = vmatpush1.bf16.msra.mxu0 %v505
  %537 = vmatprep.subr.bf16.mxu0 %v504
  %538 = vmatpush1.bf16.msra.mxu0 %v503
  %539 = vmatprep.subr.bf16.mxu0 %v502
  %540 = vmatpush1.bf16.msra.mxu0 %v501
  %541 = vmatprep.subr.bf16.mxu0 %v500
  %542 = vmatpush1.bf16.msra.mxu0 %v499
  %543 = vmatprep.subr.bf16.mxu0 %v498
  %544 = vmatpush1.bf16.msra.mxu0 %v497
  %545 = vmatprep.subr.bf16.mxu0 0
  %546 = vmatpush2.bf16.msra.mxu0 0
  %547 = vmatprep.subr.bf16.mxu0 0
  %548 = vmatpush2.bf16.msra.mxu0 0
  %549 = vmatprep.subr.bf16.mxu0 0
  %550 = vmatpush2.bf16.msra.mxu0 0
  %551 = vmatprep.subr.bf16.mxu0 0
  %552 = vmatpush2.bf16.msra.mxu0 0
  %553 = vmatprep.subr.bf16.mxu0 0
  %554 = vmatpush2.bf16.msra.mxu0 0
  %555 = vmatprep.subr.bf16.mxu0 0
  %556 = vmatpush2.bf16.msra.mxu0 0
  %557 = vmatprep.subr.bf16.mxu0 0
  %558 = vmatpush2.bf16.msra.mxu0 0
  %559 = vmatprep.subr.bf16.mxu0 0
  %560 = vmatpush2.bf16.msra.mxu0 0
  %561 = vmatprep.mubr.bf16.mxu0 0
  %562 = vmatmul.mubr.bf16.gmra.mxu0 %v448
  %v563 = vpop.f32.mrf.mxu0
  %v564 = vadd.f32 %v92, %v563
  %v565 = vpop.f32.mrf.mxu0
  %v566 = vadd.f32 %v96, %v565
  %v567 = vpop.f32.mrf.mxu0
  %v568 = vpop.f32.mrf.mxu0
  %569 = vdwg.mxu0
  %v570 = vadd.f32 %v564, %v390
  %v571 = vxor.u32 %v570, 2147483648
  %v572 = vmul.f32 %v571, 1.442695
  %v573 = vpow.pop %v572
  %v574 = vadd.f32 %v573, 1.0
  %v575 = vrcp.pop %v574
  %v576 = vmul.f32 1.0, %v575
  %v577 = vadd.f32 %v566, %v429
  %v578 = vtanh.pop %v577
  %v579 = vsub.f32 %v99, %v578
  %v580 = vmul.f32 %v576, %v579
  %v581 = vadd.f32 %v578, %v580
  %582 = vst [vmem:[%s4] sm:$0xff] %v581
  %s583 = scalar_lea.vmem %s0, 24
  %v584 = vld [vmem:[%s583] sm:$0xff]
  %v585 = vld [vmem:[%s583 + $0x8] sm:$0xff]
  %v586 = vld [vmem:[%s583 + $0x10] sm:$0xff]
  %v587 = vpack.c.bf16 %v581, %v581
  %588 = vmatprep.subr.bf16.mxu0 %v268
  %589 = vmatpush1.bf16.msra.mxu0 %v267
  %590 = vmatprep.subr.bf16.mxu0 %v263
  %591 = vmatpush1.bf16.msra.mxu0 %v262
  %592 = vmatprep.subr.bf16.mxu0 %v258
  %593 = vmatpush1.bf16.msra.mxu0 %v257
  %594 = vmatprep.subr.bf16.mxu0 %v253
  %595 = vmatpush1.bf16.msra.mxu0 %v252
  %596 = vmatprep.subr.bf16.mxu0 %v248
  %597 = vmatpush1.bf16.msra.mxu0 %v247
  %598 = vmatprep.subr.bf16.mxu0 %v243
  %599 = vmatpush1.bf16.msra.mxu0 %v242
  %600 = vmatprep.subr.bf16.mxu0 %v238
  %601 = vmatpush1.bf16.msra.mxu0 %v237
  %602 = vmatprep.subr.bf16.mxu0 %v233
  %603 = vmatpush1.bf16.msra.mxu0 %v232
  %604 = vmatprep.subr.bf16.mxu0 0
  %605 = vmatpush2.bf16.msra.mxu0 0
  %606 = vmatprep.subr.bf16.mxu0 0
  %607 = vmatpush2.bf16.msra.mxu0 0
  %608 = vmatprep.subr.bf16.mxu0 0
  %609 = vmatpush2.bf16.msra.mxu0 0
  %610 = vmatprep.subr.bf16.mxu0 0
  %611 = vmatpush2.bf16.msra.mxu0 0
  %612 = vmatprep.subr.bf16.mxu0 0
  %613 = vmatpush2.bf16.msra.mxu0 0
  %614 = vmatprep.subr.bf16.mxu0 0
  %615 = vmatpush2.bf16.msra.mxu0 0
  %616 = vmatprep.subr.bf16.mxu0 0
  %617 = vmatpush2.bf16.msra.mxu0 0
  %618 = vmatprep.subr.bf16.mxu0 0
  %619 = vmatpush2.bf16.msra.mxu0 0
  %620 = vmatprep.mubr.bf16.mxu0 0
  %621 = vmatmul.mubr.bf16.gmra.mxu0 %v587
  %v622 = vpop.f32.mrf.mxu0
  %v623 = vadd.f32 0.0, %v622
  %v624 = vpop.f32.mrf.mxu0
  %v625 = vadd.f32 0.0, %v624
  %v626 = vpop.f32.mrf.mxu0
  %v627 = vpop.f32.mrf.mxu0
  %628 = vdwg.mxu0
  %629 = vmatprep.subr.bf16.mxu0 %v270
  %630 = vmatpush1.bf16.msra.mxu0 %v269
  %631 = vmatprep.subr.bf16.mxu0 %v265
  %632 = vmatpush1.bf16.msra.mxu0 %v264
  %633 = vmatprep.subr.bf16.mxu0 %v260
  %634 = vmatpush1.bf16.msra.mxu0 %v259
  %635 = vmatprep.subr.bf16.mxu0 %v255
  %636 = vmatpush1.bf16.msra.mxu0 %v254
  %637 = vmatprep.subr.bf16.mxu0 %v250
  %638 = vmatpush1.bf16.msra.mxu0 %v249
  %639 = vmatprep.subr.bf16.mxu0 %v245
  %640 = vmatpush1.bf16.msra.mxu0 %v244
  %641 = vmatprep.subr.bf16.mxu0 %v240
  %642 = vmatpush1.bf16.msra.mxu0 %v239
  %643 = vmatprep.subr.bf16.mxu0 %v235
  %644 = vmatpush1.bf16.msra.mxu0 %v234
  %645 = vmatprep.subr.bf16.mxu0 0
  %646 = vmatpush2.bf16.msra.mxu0 0
  %647 = vmatprep.subr.bf16.mxu0 0
  %648 = vmatpush2.bf16.msra.mxu0 0
  %649 = vmatprep.subr.bf16.mxu0 0
  %650 = vmatpush2.bf16.msra.mxu0 0
  %651 = vmatprep.subr.bf16.mxu0 0
  %652 = vmatpush2.bf16.msra.mxu0 0
  %653 = vmatprep.subr.bf16.mxu0 0
  %654 = vmatpush2.bf16.msra.mxu0 0
  %655 = vmatprep.subr.bf16.mxu0 0
  %656 = vmatpush2.bf16.msra.mxu0 0
  %657 = vmatprep.subr.bf16.mxu0 0
  %658 = vmatpush2.bf16.msra.mxu0 0
  %659 = vmatprep.subr.bf16.mxu0 0
  %660 = vmatpush2.bf16.msra.mxu0 0
  %661 = vmatprep.mubr.bf16.mxu0 0
  %662 = vmatmul.mubr.bf16.gmra.mxu0 %v587
  %v663 = vpop.f32.mrf.mxu0
  %v664 = vadd.f32 0.0, %v663
  %v665 = vpop.f32.mrf.mxu0
  %v666 = vadd.f32 0.0, %v665
  %v667 = vpop.f32.mrf.mxu0
  %v668 = vpop.f32.mrf.mxu0
  %669 = vdwg.mxu0
  %670 = vmatprep.subr.bf16.mxu0 0
  %671 = vmatpush1.bf16.msra.mxu0 %v271
  %672 = vmatprep.subr.bf16.mxu0 0
  %673 = vmatpush1.bf16.msra.mxu0 %v266
  %674 = vmatprep.subr.bf16.mxu0 0
  %675 = vmatpush1.bf16.msra.mxu0 %v261
  %676 = vmatprep.subr.bf16.mxu0 0
  %677 = vmatpush1.bf16.msra.mxu0 %v256
  %678 = vmatprep.subr.bf16.mxu0 0
  %679 = vmatpush1.bf16.msra.mxu0 %v251
  %680 = vmatprep.subr.bf16.mxu0 0
  %681 = vmatpush1.bf16.msra.mxu0 %v246
  %682 = vmatprep.subr.bf16.mxu0 0
  %683 = vmatpush1.bf16.msra.mxu0 %v241
  %684 = vmatprep.subr.bf16.mxu0 0
  %685 = vmatpush1.bf16.msra.mxu0 %v236
  %686 = vmatprep.subr.bf16.mxu0 0
  %687 = vmatpush2.bf16.msra.mxu0 0
  %688 = vmatprep.subr.bf16.mxu0 0
  %689 = vmatpush2.bf16.msra.mxu0 0
  %690 = vmatprep.subr.bf16.mxu0 0
  %691 = vmatpush2.bf16.msra.mxu0 0
  %692 = vmatprep.subr.bf16.mxu0 0
  %693 = vmatpush2.bf16.msra.mxu0 0
  %694 = vmatprep.subr.bf16.mxu0 0
  %695 = vmatpush2.bf16.msra.mxu0 0
  %696 = vmatprep.subr.bf16.mxu0 0
  %697 = vmatpush2.bf16.msra.mxu0 0
  %698 = vmatprep.subr.bf16.mxu0 0
  %699 = vmatpush2.bf16.msra.mxu0 0
  %700 = vmatprep.subr.bf16.mxu0 0
  %701 = vmatpush2.bf16.msra.mxu0 0
  %702 = vmatprep.mubr.bf16.mxu0 0
  %703 = vmatmul.mubr.bf16.gmra.mxu0 %v587
  %v704 = vpop.f32.mrf.mxu0
  %v705 = vadd.f32 0.0, %v704
  %v706 = vpop.f32.mrf.mxu0
  %v707 = vpop.f32.mrf.mxu0
  %v708 = vpop.f32.mrf.mxu0
  %709 = vdwg.mxu0
  %v710 = vadd.f32 %v584, %v623
  %v711 = vtanh.pop %v710
  %v712 = vadd.f32 %v585, %v625
  %v713 = vtanh.pop %v712
  %v714 = vadd.f32 %v586, %v664
  %v715 = vtanh.pop %v714
  %v716 = vsub.f32 1.0, %v711
  %v717 = vmul.f32 %v711, %v716
  %v718 = vsub.f32 1.0, %v713
  %v719 = vmul.f32 %v713, %v718
  %v720 = vsub.f32 1.0, %v715
  %v721 = vmul.f32 %v715, %v720
  %v722 = vmul.f32 %v719, %v721
  %v723 = vmul.f32 %v717, %v722
  %v724 = vpack.c.bf16 %v723, %v723
  %725 = vmatprep.subr.bf16.mxu0 %v512
  %726 = vmatpush1.bf16.msra.mxu0 %v511
  %727 = vmatprep.subr.bf16.mxu0 %v510
  %728 = vmatpush1.bf16.msra.mxu0 %v509
  %729 = vmatprep.subr.bf16.mxu0 %v508
  %730 = vmatpush1.bf16.msra.mxu0 %v507
  %731 = vmatprep.subr.bf16.mxu0 %v506
  %732 = vmatpush1.bf16.msra.mxu0 %v505
  %733 = vmatprep.subr.bf16.mxu0 %v504
  %734 = vmatpush1.bf16.msra.mxu0 %v503
  %735 = vmatprep.subr.bf16.mxu0 %v502
  %736 = vmatpush1.bf16.msra.mxu0 %v501
  %737 = vmatprep.subr.bf16.mxu0 %v500
  %738 = vmatpush1.bf16.msra.mxu0 %v499
  %739 = vmatprep.subr.bf16.mxu0 %v498
  %740 = vmatpush1.bf16.msra.mxu0 %v497
  %741 = vmatprep.subr.bf16.mxu0 0
  %742 = vmatpush2.bf16.msra.mxu0 0
  %743 = vmatprep.subr.bf16.mxu0 0
  %744 = vmatpush2.bf16.msra.mxu0 0
  %745 = vmatprep.subr.bf16.mxu0 0
  %746 = vmatpush2.bf16.msra.mxu0 0
  %747 = vmatprep.subr.bf16.mxu0 0
  %748 = vmatpush2.bf16.msra.mxu0 0
  %749 = vmatprep.subr.bf16.mxu0 0
  %750 = vmatpush2.bf16.msra.mxu0 0
  %751 = vmatprep.subr.bf16.mxu0 0
  %752 = vmatpush2.bf16.msra.mxu0 0
  %753 = vmatprep.subr.bf16.mxu0 0
  %754 = vmatpush2.bf16.msra.mxu0 0
  %755 = vmatprep.subr.bf16.mxu0 0
  %756 = vmatpush2.bf16.msra.mxu0 0
  %757 = vmatprep.mubr.bf16.mxu0 0
  %758 = vmatmul.mubr.bf16.gmra.mxu0 %v724
  %v759 = vpop.f32.mrf.mxu0
  %v760 = vadd.f32 %v92, %v759
  %v761 = vpop.f32.mrf.mxu0
  %v762 = vadd.f32 %v96, %v761
  %v763 = vpop.f32.mrf.mxu0
  %v764 = vpop.f32.mrf.mxu0
  %765 = vdwg.mxu0
  %v766 = vadd.f32 %v760, %v666
  %v767 = vxor.u32 %v766, 2147483648
  %v768 = vmul.f32 %v767, 1.442695
  %v769 = vpow.pop %v768
  %v770 = vadd.f32 %v769, 1.0
  %v771 = vrcp.pop %v770
  %v772 = vmul.f32 1.0, %v771
  %v773 = vadd.f32 %v762, %v705
  %v774 = vtanh.pop %v773
  %v775 = vsub.f32 %v581, %v774
  %v776 = vmul.f32 %v772, %v775
  %v777 = vadd.f32 %v774, %v776
  %s778 = scalar_lea.vmem %s4, 8
  %779 = vst [vmem:[%s778] sm:$0xff] %v777
  %s780 = scalar_lea.vmem %s0, 48
  %v781 = vld [vmem:[%s780] sm:$0xff]
  %v782 = vld [vmem:[%s780 + $0x8] sm:$0xff]
  %v783 = vld [vmem:[%s780 + $0x10] sm:$0xff]
  %v784 = vpack.c.bf16 %v777, %v777
  %785 = vmatprep.subr.bf16.mxu0 %v268
  %786 = vmatpush1.bf16.msra.mxu0 %v267
  %787 = vmatprep.subr.bf16.mxu0 %v263
  %788 = vmatpush1.bf16.msra.mxu0 %v262
  %789 = vmatprep.subr.bf16.mxu0 %v258
  %790 = vmatpush1.bf16.msra.mxu0 %v257
  %791 = vmatprep.subr.bf16.mxu0 %v253
  %792 = vmatpush1.bf16.msra.mxu0 %v252
  %793 = vmatprep.subr.bf16.mxu0 %v248
  %794 = vmatpush1.bf16.msra.mxu0 %v247
  %795 = vmatprep.subr.bf16.mxu0 %v243
  %796 = vmatpush1.bf16.msra.mxu0 %v242
  %797 = vmatprep.subr.bf16.mxu0 %v238
  %798 = vmatpush1.bf16.msra.mxu0 %v237
  %799 = vmatprep.subr.bf16.mxu0 %v233
  %800 = vmatpush1.bf16.msra.mxu0 %v232
  %801 = vmatprep.subr.bf16.mxu0 0
  %802 = vmatpush2.bf16.msra.mxu0 0
  %803 = vmatprep.subr.bf16.mxu0 0
  %804 = vmatpush2.bf16.msra.mxu0 0
  %805 = vmatprep.subr.bf16.mxu0 0
  %806 = vmatpush2.bf16.msra.mxu0 0
  %807 = vmatprep.subr.bf16.mxu0 0
  %808 = vmatpush2.bf16.msra.mxu0 0
  %809 = vmatprep.subr.bf16.mxu0 0
  %810 = vmatpush2.bf16.msra.mxu0 0
  %811 = vmatprep.subr.bf16.mxu0 0
  %812 = vmatpush2.bf16.msra.mxu0 0
  %813 = vmatprep.subr.bf16.mxu0 0
  %814 = vmatpush2.bf16.msra.mxu0 0
  %815 = vmatprep.subr.bf16.mxu0 0
  %816 = vmatpush2.bf16.msra.mxu0 0
  %817 = vmatprep.mubr.bf16.mxu0 0
  %818 = vmatmul.mubr.bf16.gmra.mxu0 %v784
  %v819 = vpop.f32.mrf.mxu0
  %v820 = vadd.f32 0.0, %v819
  %v821 = vpop.f32.mrf.mxu0
  %v822 = vadd.f32 0.0, %v821
  %v823 = vpop.f32.mrf.mxu0
  %v824 = vpop.f32.mrf.mxu0
  %825 = vdwg.mxu0
  %826 = vmatprep.subr.bf16.mxu0 %v270
  %827 = vmatpush1.bf16.msra.mxu0 %v269
  %828 = vmatprep.subr.bf16.mxu0 %v265
  %829 = vmatpush1.bf16.msra.mxu0 %v264
  %830 = vmatprep.subr.bf16.mxu0 %v260
  %831 = vmatpush1.bf16.msra.mxu0 %v259
  %832 = vmatprep.subr.bf16.mxu0 %v255
  %833 = vmatpush1.bf16.msra.mxu0 %v254
  %834 = vmatprep.subr.bf16.mxu0 %v250
  %835 = vmatpush1.bf16.msra.mxu0 %v249
  %836 = vmatprep.subr.bf16.mxu0 %v245
  %837 = vmatpush1.bf16.msra.mxu0 %v244
  %838 = vmatprep.subr.bf16.mxu0 %v240
  %839 = vmatpush1.bf16.msra.mxu0 %v239
  %840 = vmatprep.subr.bf16.mxu0 %v235
  %841 = vmatpush1.bf16.msra.mxu0 %v234
  %842 = vmatprep.subr.bf16.mxu0 0
  %843 = vmatpush2.bf16.msra.mxu0 0
  %844 = vmatprep.subr.bf16.mxu0 0
  %845 = vmatpush2.bf16.msra.mxu0 0
  %846 = vmatprep.subr.bf16.mxu0 0
  %847 = vmatpush2.bf16.msra.mxu0 0
  %848 = vmatprep.subr.bf16.mxu0 0
  %849 = vmatpush2.bf16.msra.mxu0 0
  %850 = vmatprep.subr.bf16.mxu0 0
  %851 = vmatpush2.bf16.msra.mxu0 0
  %852 = vmatprep.subr.bf16.mxu0 0
  %853 = vmatpush2.bf16.msra.mxu0 0
  %854 = vmatprep.subr.bf16.mxu0 0
  %855 = vmatpush2.bf16.msra.mxu0 0
  %856 = vmatprep.subr.bf16.mxu0 0
  %857 = vmatpush2.bf16.msra.mxu0 0
  %858 = vmatprep.mubr.bf16.mxu0 0
  %859 = vmatmul.mubr.bf16.gmra.mxu0 %v784
  %v860 = vpop.f32.mrf.mxu0
  %v861 = vadd.f32 0.0, %v860
  %v862 = vpop.f32.mrf.mxu0
  %v863 = vadd.f32 0.0, %v862
  %v864 = vpop.f32.mrf.mxu0
  %v865 = vpop.f32.mrf.mxu0
  %866 = vdwg.mxu0
  %867 = vmatprep.subr.bf16.mxu0 0
  %868 = vmatpush1.bf16.msra.mxu0 %v271
  %869 = vmatprep.subr.bf16.mxu0 0
  %870 = vmatpush1.bf16.msra.mxu0 %v266
  %871 = vmatprep.subr.bf16.mxu0 0
  %872 = vmatpush1.bf16.msra.mxu0 %v261
  %873 = vmatprep.subr.bf16.mxu0 0
  %874 = vmatpush1.bf16.msra.mxu0 %v256
  %875 = vmatprep.subr.bf16.mxu0 0
  %876 = vmatpush1.bf16.msra.mxu0 %v251
  %877 = vmatprep.subr.bf16.mxu0 0
  %878 = vmatpush1.bf16.msra.mxu0 %v246
  %879 = vmatprep.subr.bf16.mxu0 0
  %880 = vmatpush1.bf16.msra.mxu0 %v241
  %881 = vmatprep.subr.bf16.mxu0 0
  %882 = vmatpush1.bf16.msra.mxu0 %v236
  %883 = vmatprep.subr.bf16.mxu0 0
  %884 = vmatpush2.bf16.msra.mxu0 0
  %885 = vmatprep.subr.bf16.mxu0 0
  %886 = vmatpush2.bf16.msra.mxu0 0
  %887 = vmatprep.subr.bf16.mxu0 0
  %888 = vmatpush2.bf16.msra.mxu0 0
  %889 = vmatprep.subr.bf16.mxu0 0
  %890 = vmatpush2.bf16.msra.mxu0 0
  %891 = vmatprep.subr.bf16.mxu0 0
  %892 = vmatpush2.bf16.msra.mxu0 0
  %893 = vmatprep.subr.bf16.mxu0 0
  %894 = vmatpush2.bf16.msra.mxu0 0
  %895 = vmatprep.subr.bf16.mxu0 0
  %896 = vmatpush2.bf16.msra.mxu0 0
  %897 = vmatprep.subr.bf16.mxu0 0
  %898 = vmatpush2.bf16.msra.mxu0 0
  %899 = vmatprep.mubr.bf16.mxu0 0
  %900 = vmatmul.mubr.bf16.gmra.mxu0 %v784
  %v901 = vpop.f32.mrf.mxu0
  %v902 = vadd.f32 0.0, %v901
  %v903 = vpop.f32.mrf.mxu0
  %v904 = vpop.f32.mrf.mxu0
  %v905 = vpop.f32.mrf.mxu0
  %906 = vdwg.mxu0
  %v907 = vadd.f32 %v781, %v820
  %v908 = vtanh.pop %v907
  %v909 = vadd.f32 %v782, %v822
  %v910 = vtanh.pop %v909
  %v911 = vadd.f32 %v783, %v861
  %v912 = vtanh.pop %v911
  %v913 = vsub.f32 1.0, %v908
  %v914 = vmul.f32 %v908, %v913
  %v915 = vsub.f32 1.0, %v910
  %v916 = vmul.f32 %v910, %v915
  %v917 = vsub.f32 1.0, %v912
  %v918 = vmul.f32 %v912, %v917
  %v919 = vmul.f32 %v916, %v918
  %v920 = vmul.f32 %v914, %v919
  %v921 = vpack.c.bf16 %v920, %v920
  %922 = vmatprep.subr.bf16.mxu0 %v512
  %923 = vmatpush1.bf16.msra.mxu0 %v511
  %924 = vmatprep.subr.bf16.mxu0 %v510
  %925 = vmatpush1.bf16.msra.mxu0 %v509
  %926 = vmatprep.subr.bf16.mxu0 %v508
  %927 = vmatpush1.bf16.msra.mxu0 %v507
  %928 = vmatprep.subr.bf16.mxu0 %v506
  %929 = vmatpush1.bf16.msra.mxu0 %v505
  %930 = vmatprep.subr.bf16.mxu0 %v504
  %931 = vmatpush1.bf16.msra.mxu0 %v503
  %932 = vmatprep.subr.bf16.mxu0 %v502
  %933 = vmatpush1.bf16.msra.mxu0 %v501
  %934 = vmatprep.subr.bf16.mxu0 %v500
  %935 = vmatpush1.bf16.msra.mxu0 %v499
  %936 = vmatprep.subr.bf16.mxu0 %v498
  %937 = vmatpush1.bf16.msra.mxu0 %v497
  %938 = vmatprep.subr.bf16.mxu0 0
  %939 = vmatpush2.bf16.msra.mxu0 0
  %940 = vmatprep.subr.bf16.mxu0 0
  %941 = vmatpush2.bf16.msra.mxu0 0
  %942 = vmatprep.subr.bf16.mxu0 0
  %943 = vmatpush2.bf16.msra.mxu0 0
  %944 = vmatprep.subr.bf16.mxu0 0
  %945 = vmatpush2.bf16.msra.mxu0 0
  %946 = vmatprep.subr.bf16.mxu0 0
  %947 = vmatpush2.bf16.msra.mxu0 0
  %948 = vmatprep.subr.bf16.mxu0 0
  %949 = vmatpush2.bf16.msra.mxu0 0
  %950 = vmatprep.subr.bf16.mxu0 0
  %951 = vmatpush2.bf16.msra.mxu0 0
  %952 = vmatprep.subr.bf16.mxu0 0
  %953 = vmatpush2.bf16.msra.mxu0 0
  %954 = vmatprep.mubr.bf16.mxu0 0
  %955 = vmatmul.mubr.bf16.gmra.mxu0 %v921
  %v956 = vpop.f32.mrf.mxu0
  %v957 = vadd.f32 %v92, %v956
  %v958 = vpop.f32.mrf.mxu0
  %v959 = vadd.f32 %v96, %v958
  %v960 = vpop.f32.mrf.mxu0
  %v961 = vpop.f32.mrf.mxu0
  %962 = vdwg.mxu0
  %v963 = vadd.f32 %v957, %v863
  %v964 = vxor.u32 %v963, 2147483648
  %v965 = vmul.f32 %v964, 1.442695
  %v966 = vpow.pop %v965
  %v967 = vadd.f32 %v966, 1.0
  %v968 = vrcp.pop %v967
  %v969 = vmul.f32 1.0, %v968
  %v970 = vadd.f32 %v959, %v902
  %v971 = vtanh.pop %v970
  %v972 = vsub.f32 %v777, %v971
  %v973 = vmul.f32 %v969, %v972
  %v974 = vadd.f32 %v971, %v973
  %s975 = scalar_lea.vmem %s4, 16
  %976 = vst [vmem:[%s975] sm:$0xff] %v974
  %s977 = scalar_lea.vmem %s0, 72
  %v978 = vld [vmem:[%s977] sm:$0xff]
  %v979 = vld [vmem:[%s977 + $0x8] sm:$0xff]
  %v980 = vld [vmem:[%s977 + $0x10] sm:$0xff]
  %v981 = vpack.c.bf16 %v974, %v974
  %982 = vmatprep.subr.bf16.mxu0 %v268
  %983 = vmatpush1.bf16.msra.mxu0 %v267
  %984 = vmatprep.subr.bf16.mxu0 %v263
  %985 = vmatpush1.bf16.msra.mxu0 %v262
  %986 = vmatprep.subr.bf16.mxu0 %v258
  %987 = vmatpush1.bf16.msra.mxu0 %v257
  %988 = vmatprep.subr.bf16.mxu0 %v253
  %989 = vmatpush1.bf16.msra.mxu0 %v252
  %990 = vmatprep.subr.bf16.mxu0 %v248
  %991 = vmatpush1.bf16.msra.mxu0 %v247
  %992 = vmatprep.subr.bf16.mxu0 %v243
  %993 = vmatpush1.bf16.msra.mxu0 %v242
  %994 = vmatprep.subr.bf16.mxu0 %v238
  %995 = vmatpush1.bf16.msra.mxu0 %v237
  %996 = vmatprep.subr.bf16.mxu0 %v233
  %997 = vmatpush1.bf16.msra.mxu0 %v232
  %998 = vmatprep.subr.bf16.mxu0 0
  %999 = vmatpush2.bf16.msra.mxu0 0
  %1000 = vmatprep.subr.bf16.mxu0 0
  %1001 = vmatpush2.bf16.msra.mxu0 0
  %1002 = vmatprep.subr.bf16.mxu0 0
  %1003 = vmatpush2.bf16.msra.mxu0 0
  %1004 = vmatprep.subr.bf16.mxu0 0
  %1005 = vmatpush2.bf16.msra.mxu0 0
  %1006 = vmatprep.subr.bf16.mxu0 0
  %1007 = vmatpush2.bf16.msra.mxu0 0
  %1008 = vmatprep.subr.bf16.mxu0 0
  %1009 = vmatpush2.bf16.msra.mxu0 0
  %1010 = vmatprep.subr.bf16.mxu0 0
  %1011 = vmatpush2.bf16.msra.mxu0 0
  %1012 = vmatprep.subr.bf16.mxu0 0
  %1013 = vmatpush2.bf16.msra.mxu0 0
  %1014 = vmatprep.mubr.bf16.mxu0 0
  %1015 = vmatmul.mubr.bf16.gmra.mxu0 %v981
  %v1016 = vpop.f32.mrf.mxu0
  %v1017 = vadd.f32 0.0, %v1016
  %v1018 = vpop.f32.mrf.mxu0
  %v1019 = vadd.f32 0.0, %v1018
  %v1020 = vpop.f32.mrf.mxu0
  %v1021 = vpop.f32.mrf.mxu0
  %1022 = vdwg.mxu0
  %1023 = vmatprep.subr.bf16.mxu0 %v270
  %1024 = vmatpush1.bf16.msra.mxu0 %v269
  %1025 = vmatprep.subr.bf16.mxu0 %v265
  %1026 = vmatpush1.bf16.msra.mxu0 %v264
  %1027 = vmatprep.subr.bf16.mxu0 %v260
  %1028 = vmatpush1.bf16.msra.mxu0 %v259
  %1029 = vmatprep.subr.bf16.mxu0 %v255
  %1030 = vmatpush1.bf16.msra.mxu0 %v254
  %1031 = vmatprep.subr.bf16.mxu0 %v250
  %1032 = vmatpush1.bf16.msra.mxu0 %v249
  %1033 = vmatprep.subr.bf16.mxu0 %v245
  %1034 = vmatpush1.bf16.msra.mxu0 %v244
  %1035 = vmatprep.subr.bf16.mxu0 %v240
  %1036 = vmatpush1.bf16.msra.mxu0 %v239
  %1037 = vmatprep.subr.bf16.mxu0 %v235
  %1038 = vmatpush1.bf16.msra.mxu0 %v234
  %1039 = vmatprep.subr.bf16.mxu0 0
  %1040 = vmatpush2.bf16.msra.mxu0 0
  %1041 = vmatprep.subr.bf16.mxu0 0
  %1042 = vmatpush2.bf16.msra.mxu0 0
  %1043 = vmatprep.subr.bf16.mxu0 0
  %1044 = vmatpush2.bf16.msra.mxu0 0
  %1045 = vmatprep.subr.bf16.mxu0 0
  %1046 = vmatpush2.bf16.msra.mxu0 0
  %1047 = vmatprep.subr.bf16.mxu0 0
  %1048 = vmatpush2.bf16.msra.mxu0 0
  %1049 = vmatprep.subr.bf16.mxu0 0
  %1050 = vmatpush2.bf16.msra.mxu0 0
  %1051 = vmatprep.subr.bf16.mxu0 0
  %1052 = vmatpush2.bf16.msra.mxu0 0
  %1053 = vmatprep.subr.bf16.mxu0 0
  %1054 = vmatpush2.bf16.msra.mxu0 0
  %1055 = vmatprep.mubr.bf16.mxu0 0
  %1056 = vmatmul.mubr.bf16.gmra.mxu0 %v981
  %v1057 = vpop.f32.mrf.mxu0
  %v1058 = vadd.f32 0.0, %v1057
  %v1059 = vpop.f32.mrf.mxu0
  %v1060 = vadd.f32 0.0, %v1059
  %v1061 = vpop.f32.mrf.mxu0
  %v1062 = vpop.f32.mrf.mxu0
  %1063 = vdwg.mxu0
  %1064 = vmatprep.subr.bf16.mxu0 0
  %1065 = vmatpush1.bf16.msra.mxu0 %v271
  %1066 = vmatprep.subr.bf16.mxu0 0
  %1067 = vmatpush1.bf16.msra.mxu0 %v266
  %1068 = vmatprep.subr.bf16.mxu0 0
  %1069 = vmatpush1.bf16.msra.mxu0 %v261
  %1070 = vmatprep.subr.bf16.mxu0 0
  %1071 = vmatpush1.bf16.msra.mxu0 %v256
  %1072 = vmatprep.subr.bf16.mxu0 0
  %1073 = vmatpush1.bf16.msra.mxu0 %v251
  %1074 = vmatprep.subr.bf16.mxu0 0
  %1075 = vmatpush1.bf16.msra.mxu0 %v246
  %1076 = vmatprep.subr.bf16.mxu0 0
  %1077 = vmatpush1.bf16.msra.mxu0 %v241
  %1078 = vmatprep.subr.bf16.mxu0 0
  %1079 = vmatpush1.bf16.msra.mxu0 %v236
  %1080 = vmatprep.subr.bf16.mxu0 0
  %1081 = vmatpush2.bf16.msra.mxu0 0
  %1082 = vmatprep.subr.bf16.mxu0 0
  %1083 = vmatpush2.bf16.msra.mxu0 0
  %1084 = vmatprep.subr.bf16.mxu0 0
  %1085 = vmatpush2.bf16.msra.mxu0 0
  %1086 = vmatprep.subr.bf16.mxu0 0
  %1087 = vmatpush2.bf16.msra.mxu0 0
  %1088 = vmatprep.subr.bf16.mxu0 0
  %1089 = vmatpush2.bf16.msra.mxu0 0
  %1090 = vmatprep.subr.bf16.mxu0 0
  %1091 = vmatpush2.bf16.msra.mxu0 0
  %1092 = vmatprep.subr.bf16.mxu0 0
  %1093 = vmatpush2.bf16.msra.mxu0 0
  %1094 = vmatprep.subr.bf16.mxu0 0
  %1095 = vmatpush2.bf16.msra.mxu0 0
  %1096 = vmatprep.mubr.bf16.mxu0 0
  %1097 = vmatmul.mubr.bf16.gmra.mxu0 %v981
  %v1098 = vpop.f32.mrf.mxu0
  %v1099 = vadd.f32 0.0, %v1098
  %v1100 = vpop.f32.mrf.mxu0
  %v1101 = vpop.f32.mrf.mxu0
  %v1102 = vpop.f32.mrf.mxu0
  %1103 = vdwg.mxu0
  %v1104 = vadd.f32 %v978, %v1017
  %v1105 = vtanh.pop %v1104
  %v1106 = vadd.f32 %v979, %v1019
  %v1107 = vtanh.pop %v1106
  %v1108 = vadd.f32 %v980, %v1058
  %v1109 = vtanh.pop %v1108
  %v1110 = vsub.f32 1.0, %v1105
  %v1111 = vmul.f32 %v1105, %v1110
  %v1112 = vsub.f32 1.0, %v1107
  %v1113 = vmul.f32 %v1107, %v1112
  %v1114 = vsub.f32 1.0, %v1109
  %v1115 = vmul.f32 %v1109, %v1114
  %v1116 = vmul.f32 %v1113, %v1115
  %v1117 = vmul.f32 %v1111, %v1116
  %v1118 = vpack.c.bf16 %v1117, %v1117
  %1119 = vmatprep.subr.bf16.mxu0 %v512
  %1120 = vmatpush1.bf16.msra.mxu0 %v511
  %1121 = vmatprep.subr.bf16.mxu0 %v510
  %1122 = vmatpush1.bf16.msra.mxu0 %v509
  %1123 = vmatprep.subr.bf16.mxu0 %v508
  %1124 = vmatpush1.bf16.msra.mxu0 %v507
  %1125 = vmatprep.subr.bf16.mxu0 %v506
  %1126 = vmatpush1.bf16.msra.mxu0 %v505
  %1127 = vmatprep.subr.bf16.mxu0 %v504
  %1128 = vmatpush1.bf16.msra.mxu0 %v503
  %1129 = vmatprep.subr.bf16.mxu0 %v502
  %1130 = vmatpush1.bf16.msra.mxu0 %v501
  %1131 = vmatprep.subr.bf16.mxu0 %v500
  %1132 = vmatpush1.bf16.msra.mxu0 %v499
  %1133 = vmatprep.subr.bf16.mxu0 %v498
  %1134 = vmatpush1.bf16.msra.mxu0 %v497
  %1135 = vmatprep.subr.bf16.mxu0 0
  %1136 = vmatpush2.bf16.msra.mxu0 0
  %1137 = vmatprep.subr.bf16.mxu0 0
  %1138 = vmatpush2.bf16.msra.mxu0 0
  %1139 = vmatprep.subr.bf16.mxu0 0
  %1140 = vmatpush2.bf16.msra.mxu0 0
  %1141 = vmatprep.subr.bf16.mxu0 0
  %1142 = vmatpush2.bf16.msra.mxu0 0
  %1143 = vmatprep.subr.bf16.mxu0 0
  %1144 = vmatpush2.bf16.msra.mxu0 0
  %1145 = vmatprep.subr.bf16.mxu0 0
  %1146 = vmatpush2.bf16.msra.mxu0 0
  %1147 = vmatprep.subr.bf16.mxu0 0
  %1148 = vmatpush2.bf16.msra.mxu0 0
  %1149 = vmatprep.subr.bf16.mxu0 0
  %1150 = vmatpush2.bf16.msra.mxu0 0
  %1151 = vmatprep.mubr.bf16.mxu0 0
  %1152 = vmatmul.mubr.bf16.gmra.mxu0 %v1118
  %v1153 = vpop.f32.mrf.mxu0
  %v1154 = vadd.f32 %v92, %v1153
  %v1155 = vpop.f32.mrf.mxu0
  %v1156 = vadd.f32 %v96, %v1155
  %v1157 = vpop.f32.mrf.mxu0
  %v1158 = vpop.f32.mrf.mxu0
  %1159 = vdwg.mxu0
  %v1160 = vadd.f32 %v1154, %v1060
  %v1161 = vxor.u32 %v1160, 2147483648
  %v1162 = vmul.f32 %v1161, 1.442695
  %v1163 = vpow.pop %v1162
  %v1164 = vadd.f32 %v1163, 1.0
  %v1165 = vrcp.pop %v1164
  %v1166 = vmul.f32 1.0, %v1165
  %v1167 = vadd.f32 %v1156, %v1099
  %v1168 = vtanh.pop %v1167
  %v1169 = vsub.f32 %v974, %v1168
  %v1170 = vmul.f32 %v1166, %v1169
  %v1171 = vadd.f32 %v1168, %v1170
  %s1172 = scalar_lea.vmem %s4, 24
  %1173 = vst [vmem:[%s1172] sm:$0xff] %v1171
  %s1174 = scalar_lea.vmem %s0, 96
  %v1175 = vld [vmem:[%s1174] sm:$0xff]
  %v1176 = vld [vmem:[%s1174 + $0x8] sm:$0xff]
  %v1177 = vld [vmem:[%s1174 + $0x10] sm:$0xff]
  %v1178 = vpack.c.bf16 %v1171, %v1171
  %1179 = vmatprep.subr.bf16.mxu0 %v268
  %1180 = vmatpush1.bf16.msra.mxu0 %v267
  %1181 = vmatprep.subr.bf16.mxu0 %v263
  %1182 = vmatpush1.bf16.msra.mxu0 %v262
  %1183 = vmatprep.subr.bf16.mxu0 %v258
  %1184 = vmatpush1.bf16.msra.mxu0 %v257
  %1185 = vmatprep.subr.bf16.mxu0 %v253
  %1186 = vmatpush1.bf16.msra.mxu0 %v252
  %1187 = vmatprep.subr.bf16.mxu0 %v248
  %1188 = vmatpush1.bf16.msra.mxu0 %v247
  %1189 = vmatprep.subr.bf16.mxu0 %v243
  %1190 = vmatpush1.bf16.msra.mxu0 %v242
  %1191 = vmatprep.subr.bf16.mxu0 %v238
  %1192 = vmatpush1.bf16.msra.mxu0 %v237
  %1193 = vmatprep.subr.bf16.mxu0 %v233
  %1194 = vmatpush1.bf16.msra.mxu0 %v232
  %1195 = vmatprep.subr.bf16.mxu0 0
  %1196 = vmatpush2.bf16.msra.mxu0 0
  %1197 = vmatprep.subr.bf16.mxu0 0
  %1198 = vmatpush2.bf16.msra.mxu0 0
  %1199 = vmatprep.subr.bf16.mxu0 0
  %1200 = vmatpush2.bf16.msra.mxu0 0
  %1201 = vmatprep.subr.bf16.mxu0 0
  %1202 = vmatpush2.bf16.msra.mxu0 0
  %1203 = vmatprep.subr.bf16.mxu0 0
  %1204 = vmatpush2.bf16.msra.mxu0 0
  %1205 = vmatprep.subr.bf16.mxu0 0
  %1206 = vmatpush2.bf16.msra.mxu0 0
  %1207 = vmatprep.subr.bf16.mxu0 0
  %1208 = vmatpush2.bf16.msra.mxu0 0
  %1209 = vmatprep.subr.bf16.mxu0 0
  %1210 = vmatpush2.bf16.msra.mxu0 0
  %1211 = vmatprep.mubr.bf16.mxu0 0
  %1212 = vmatmul.mubr.bf16.gmra.mxu0 %v1178
  %v1213 = vpop.f32.mrf.mxu0
  %v1214 = vadd.f32 0.0, %v1213
  %v1215 = vpop.f32.mrf.mxu0
  %v1216 = vadd.f32 0.0, %v1215
  %v1217 = vpop.f32.mrf.mxu0
  %v1218 = vpop.f32.mrf.mxu0
  %1219 = vdwg.mxu0
  %1220 = vmatprep.subr.bf16.mxu0 %v270
  %1221 = vmatpush1.bf16.msra.mxu0 %v269
  %1222 = vmatprep.subr.bf16.mxu0 %v265
  %1223 = vmatpush1.bf16.msra.mxu0 %v264
  %1224 = vmatprep.subr.bf16.mxu0 %v260
  %1225 = vmatpush1.bf16.msra.mxu0 %v259
  %1226 = vmatprep.subr.bf16.mxu0 %v255
  %1227 = vmatpush1.bf16.msra.mxu0 %v254
  %1228 = vmatprep.subr.bf16.mxu0 %v250
  %1229 = vmatpush1.bf16.msra.mxu0 %v249
  %1230 = vmatprep.subr.bf16.mxu0 %v245
  %1231 = vmatpush1.bf16.msra.mxu0 %v244
  %1232 = vmatprep.subr.bf16.mxu0 %v240
  %1233 = vmatpush1.bf16.msra.mxu0 %v239
  %1234 = vmatprep.subr.bf16.mxu0 %v235
  %1235 = vmatpush1.bf16.msra.mxu0 %v234
  %1236 = vmatprep.subr.bf16.mxu0 0
  %1237 = vmatpush2.bf16.msra.mxu0 0
  %1238 = vmatprep.subr.bf16.mxu0 0
  %1239 = vmatpush2.bf16.msra.mxu0 0
  %1240 = vmatprep.subr.bf16.mxu0 0
  %1241 = vmatpush2.bf16.msra.mxu0 0
  %1242 = vmatprep.subr.bf16.mxu0 0
  %1243 = vmatpush2.bf16.msra.mxu0 0
  %1244 = vmatprep.subr.bf16.mxu0 0
  %1245 = vmatpush2.bf16.msra.mxu0 0
  %1246 = vmatprep.subr.bf16.mxu0 0
  %1247 = vmatpush2.bf16.msra.mxu0 0
  %1248 = vmatprep.subr.bf16.mxu0 0
  %1249 = vmatpush2.bf16.msra.mxu0 0
  %1250 = vmatprep.subr.bf16.mxu0 0
  %1251 = vmatpush2.bf16.msra.mxu0 0
  %1252 = vmatprep.mubr.bf16.mxu0 0
  %1253 = vmatmul.mubr.bf16.gmra.mxu0 %v1178
  %v1254 = vpop.f32.mrf.mxu0
  %v1255 = vadd.f32 0.0, %v1254
  %v1256 = vpop.f32.mrf.mxu0
  %v1257 = vadd.f32 0.0, %v1256
  %v1258 = vpop.f32.mrf.mxu0
  %v1259 = vpop.f32.mrf.mxu0
  %1260 = vdwg.mxu0
  %1261 = vmatprep.subr.bf16.mxu0 0
  %1262 = vmatpush1.bf16.msra.mxu0 %v271
  %1263 = vmatprep.subr.bf16.mxu0 0
  %1264 = vmatpush1.bf16.msra.mxu0 %v266
  %1265 = vmatprep.subr.bf16.mxu0 0
  %1266 = vmatpush1.bf16.msra.mxu0 %v261
  %1267 = vmatprep.subr.bf16.mxu0 0
  %1268 = vmatpush1.bf16.msra.mxu0 %v256
  %1269 = vmatprep.subr.bf16.mxu0 0
  %1270 = vmatpush1.bf16.msra.mxu0 %v251
  %1271 = vmatprep.subr.bf16.mxu0 0
  %1272 = vmatpush1.bf16.msra.mxu0 %v246
  %1273 = vmatprep.subr.bf16.mxu0 0
  %1274 = vmatpush1.bf16.msra.mxu0 %v241
  %1275 = vmatprep.subr.bf16.mxu0 0
  %1276 = vmatpush1.bf16.msra.mxu0 %v236
  %1277 = vmatprep.subr.bf16.mxu0 0
  %1278 = vmatpush2.bf16.msra.mxu0 0
  %1279 = vmatprep.subr.bf16.mxu0 0
  %1280 = vmatpush2.bf16.msra.mxu0 0
  %1281 = vmatprep.subr.bf16.mxu0 0
  %1282 = vmatpush2.bf16.msra.mxu0 0
  %1283 = vmatprep.subr.bf16.mxu0 0
  %1284 = vmatpush2.bf16.msra.mxu0 0
  %1285 = vmatprep.subr.bf16.mxu0 0
  %1286 = vmatpush2.bf16.msra.mxu0 0
  %1287 = vmatprep.subr.bf16.mxu0 0
  %1288 = vmatpush2.bf16.msra.mxu0 0
  %1289 = vmatprep.subr.bf16.mxu0 0
  %1290 = vmatpush2.bf16.msra.mxu0 0
  %1291 = vmatprep.subr.bf16.mxu0 0
  %1292 = vmatpush2.bf16.msra.mxu0 0
  %1293 = vmatprep.mubr.bf16.mxu0 0
  %1294 = vmatmul.mubr.bf16.gmra.mxu0 %v1178
  %v1295 = vpop.f32.mrf.mxu0
  %v1296 = vadd.f32 0.0, %v1295
  %v1297 = vpop.f32.mrf.mxu0
  %v1298 = vpop.f32.mrf.mxu0
  %v1299 = vpop.f32.mrf.mxu0
  %1300 = vdwg.mxu0
  %v1301 = vadd.f32 %v1175, %v1214
  %v1302 = vtanh.pop %v1301
  %v1303 = vadd.f32 %v1176, %v1216
  %v1304 = vtanh.pop %v1303
  %v1305 = vadd.f32 %v1177, %v1255
  %v1306 = vtanh.pop %v1305
  %v1307 = vsub.f32 1.0, %v1302
  %v1308 = vmul.f32 %v1302, %v1307
  %v1309 = vsub.f32 1.0, %v1304
  %v1310 = vmul.f32 %v1304, %v1309
  %v1311 = vsub.f32 1.0, %v1306
  %v1312 = vmul.f32 %v1306, %v1311
  %v1313 = vmul.f32 %v1310, %v1312
  %v1314 = vmul.f32 %v1308, %v1313
  %v1315 = vpack.c.bf16 %v1314, %v1314
  %1316 = vmatprep.subr.bf16.mxu0 %v512
  %1317 = vmatpush1.bf16.msra.mxu0 %v511
  %1318 = vmatprep.subr.bf16.mxu0 %v510
  %1319 = vmatpush1.bf16.msra.mxu0 %v509
  %1320 = vmatprep.subr.bf16.mxu0 %v508
  %1321 = vmatpush1.bf16.msra.mxu0 %v507
  %1322 = vmatprep.subr.bf16.mxu0 %v506
  %1323 = vmatpush1.bf16.msra.mxu0 %v505
  %1324 = vmatprep.subr.bf16.mxu0 %v504
  %1325 = vmatpush1.bf16.msra.mxu0 %v503
  %1326 = vmatprep.subr.bf16.mxu0 %v502
  %1327 = vmatpush1.bf16.msra.mxu0 %v501
  %1328 = vmatprep.subr.bf16.mxu0 %v500
  %1329 = vmatpush1.bf16.msra.mxu0 %v499
  %1330 = vmatprep.subr.bf16.mxu0 %v498
  %1331 = vmatpush1.bf16.msra.mxu0 %v497
  %1332 = vmatprep.subr.bf16.mxu0 0
  %1333 = vmatpush2.bf16.msra.mxu0 0
  %1334 = vmatprep.subr.bf16.mxu0 0
  %1335 = vmatpush2.bf16.msra.mxu0 0
  %1336 = vmatprep.subr.bf16.mxu0 0
  %1337 = vmatpush2.bf16.msra.mxu0 0
  %1338 = vmatprep.subr.bf16.mxu0 0
  %1339 = vmatpush2.bf16.msra.mxu0 0
  %1340 = vmatprep.subr.bf16.mxu0 0
  %1341 = vmatpush2.bf16.msra.mxu0 0
  %1342 = vmatprep.subr.bf16.mxu0 0
  %1343 = vmatpush2.bf16.msra.mxu0 0
  %1344 = vmatprep.subr.bf16.mxu0 0
  %1345 = vmatpush2.bf16.msra.mxu0 0
  %1346 = vmatprep.subr.bf16.mxu0 0
  %1347 = vmatpush2.bf16.msra.mxu0 0
  %1348 = vmatprep.mubr.bf16.mxu0 0
  %1349 = vmatmul.mubr.bf16.gmra.mxu0 %v1315
  %v1350 = vpop.f32.mrf.mxu0
  %v1351 = vadd.f32 %v92, %v1350
  %v1352 = vpop.f32.mrf.mxu0
  %v1353 = vadd.f32 %v96, %v1352
  %v1354 = vpop.f32.mrf.mxu0
  %v1355 = vpop.f32.mrf.mxu0
  %1356 = vdwg.mxu0
  %v1357 = vadd.f32 %v1351, %v1257
  %v1358 = vxor.u32 %v1357, 2147483648
  %v1359 = vmul.f32 %v1358, 1.442695
  %v1360 = vpow.pop %v1359
  %v1361 = vadd.f32 %v1360, 1.0
  %v1362 = vrcp.pop %v1361
  %v1363 = vmul.f32 1.0, %v1362
  %v1364 = vadd.f32 %v1353, %v1296
  %v1365 = vtanh.pop %v1364
  %v1366 = vsub.f32 %v1171, %v1365
  %v1367 = vmul.f32 %v1363, %v1366
  %v1368 = vadd.f32 %v1365, %v1367
  %s1369 = scalar_lea.vmem %s4, 32
  %1370 = vst [vmem:[%s1369] sm:$0xff] %v1368
  %s1371 = scalar_lea.vmem %s0, 120
  %v1372 = vld [vmem:[%s1371] sm:$0xff]
  %v1373 = vld [vmem:[%s1371 + $0x8] sm:$0xff]
  %v1374 = vld [vmem:[%s1371 + $0x10] sm:$0xff]
  %v1375 = vpack.c.bf16 %v1368, %v1368
  %1376 = vmatprep.subr.bf16.mxu0 %v268
  %1377 = vmatpush1.bf16.msra.mxu0 %v267
  %1378 = vmatprep.subr.bf16.mxu0 %v263
  %1379 = vmatpush1.bf16.msra.mxu0 %v262
  %1380 = vmatprep.subr.bf16.mxu0 %v258
  %1381 = vmatpush1.bf16.msra.mxu0 %v257
  %1382 = vmatprep.subr.bf16.mxu0 %v253
  %1383 = vmatpush1.bf16.msra.mxu0 %v252
  %1384 = vmatprep.subr.bf16.mxu0 %v248
  %1385 = vmatpush1.bf16.msra.mxu0 %v247
  %1386 = vmatprep.subr.bf16.mxu0 %v243
  %1387 = vmatpush1.bf16.msra.mxu0 %v242
  %1388 = vmatprep.subr.bf16.mxu0 %v238
  %1389 = vmatpush1.bf16.msra.mxu0 %v237
  %1390 = vmatprep.subr.bf16.mxu0 %v233
  %1391 = vmatpush1.bf16.msra.mxu0 %v232
  %1392 = vmatprep.subr.bf16.mxu0 0
  %1393 = vmatpush2.bf16.msra.mxu0 0
  %1394 = vmatprep.subr.bf16.mxu0 0
  %1395 = vmatpush2.bf16.msra.mxu0 0
  %1396 = vmatprep.subr.bf16.mxu0 0
  %1397 = vmatpush2.bf16.msra.mxu0 0
  %1398 = vmatprep.subr.bf16.mxu0 0
  %1399 = vmatpush2.bf16.msra.mxu0 0
  %1400 = vmatprep.subr.bf16.mxu0 0
  %1401 = vmatpush2.bf16.msra.mxu0 0
  %1402 = vmatprep.subr.bf16.mxu0 0
  %1403 = vmatpush2.bf16.msra.mxu0 0
  %1404 = vmatprep.subr.bf16.mxu0 0
  %1405 = vmatpush2.bf16.msra.mxu0 0
  %1406 = vmatprep.subr.bf16.mxu0 0
  %1407 = vmatpush2.bf16.msra.mxu0 0
  %1408 = vmatprep.mubr.bf16.mxu0 0
  %1409 = vmatmul.mubr.bf16.gmra.mxu0 %v1375
  %v1410 = vpop.f32.mrf.mxu0
  %v1411 = vadd.f32 0.0, %v1410
  %v1412 = vpop.f32.mrf.mxu0
  %v1413 = vadd.f32 0.0, %v1412
  %v1414 = vpop.f32.mrf.mxu0
  %v1415 = vpop.f32.mrf.mxu0
  %1416 = vdwg.mxu0
  %1417 = vmatprep.subr.bf16.mxu0 %v270
  %1418 = vmatpush1.bf16.msra.mxu0 %v269
  %1419 = vmatprep.subr.bf16.mxu0 %v265
  %1420 = vmatpush1.bf16.msra.mxu0 %v264
  %1421 = vmatprep.subr.bf16.mxu0 %v260
  %1422 = vmatpush1.bf16.msra.mxu0 %v259
  %1423 = vmatprep.subr.bf16.mxu0 %v255
  %1424 = vmatpush1.bf16.msra.mxu0 %v254
  %1425 = vmatprep.subr.bf16.mxu0 %v250
  %1426 = vmatpush1.bf16.msra.mxu0 %v249
  %1427 = vmatprep.subr.bf16.mxu0 %v245
  %1428 = vmatpush1.bf16.msra.mxu0 %v244
  %1429 = vmatprep.subr.bf16.mxu0 %v240
  %1430 = vmatpush1.bf16.msra.mxu0 %v239
  %1431 = vmatprep.subr.bf16.mxu0 %v235
  %1432 = vmatpush1.bf16.msra.mxu0 %v234
  %1433 = vmatprep.subr.bf16.mxu0 0
  %1434 = vmatpush2.bf16.msra.mxu0 0
  %1435 = vmatprep.subr.bf16.mxu0 0
  %1436 = vmatpush2.bf16.msra.mxu0 0
  %1437 = vmatprep.subr.bf16.mxu0 0
  %1438 = vmatpush2.bf16.msra.mxu0 0
  %1439 = vmatprep.subr.bf16.mxu0 0
  %1440 = vmatpush2.bf16.msra.mxu0 0
  %1441 = vmatprep.subr.bf16.mxu0 0
  %1442 = vmatpush2.bf16.msra.mxu0 0
  %1443 = vmatprep.subr.bf16.mxu0 0
  %1444 = vmatpush2.bf16.msra.mxu0 0
  %1445 = vmatprep.subr.bf16.mxu0 0
  %1446 = vmatpush2.bf16.msra.mxu0 0
  %1447 = vmatprep.subr.bf16.mxu0 0
  %1448 = vmatpush2.bf16.msra.mxu0 0
  %1449 = vmatprep.mubr.bf16.mxu0 0
  %1450 = vmatmul.mubr.bf16.gmra.mxu0 %v1375
  %v1451 = vpop.f32.mrf.mxu0
  %v1452 = vadd.f32 0.0, %v1451
  %v1453 = vpop.f32.mrf.mxu0
  %v1454 = vadd.f32 0.0, %v1453
  %v1455 = vpop.f32.mrf.mxu0
  %v1456 = vpop.f32.mrf.mxu0
  %1457 = vdwg.mxu0
  %1458 = vmatprep.subr.bf16.mxu0 0
  %1459 = vmatpush1.bf16.msra.mxu0 %v271
  %1460 = vmatprep.subr.bf16.mxu0 0
  %1461 = vmatpush1.bf16.msra.mxu0 %v266
  %1462 = vmatprep.subr.bf16.mxu0 0
  %1463 = vmatpush1.bf16.msra.mxu0 %v261
  %1464 = vmatprep.subr.bf16.mxu0 0
  %1465 = vmatpush1.bf16.msra.mxu0 %v256
  %1466 = vmatprep.subr.bf16.mxu0 0
  %1467 = vmatpush1.bf16.msra.mxu0 %v251
  %1468 = vmatprep.subr.bf16.mxu0 0
  %1469 = vmatpush1.bf16.msra.mxu0 %v246
  %1470 = vmatprep.subr.bf16.mxu0 0
  %1471 = vmatpush1.bf16.msra.mxu0 %v241
  %1472 = vmatprep.subr.bf16.mxu0 0
  %1473 = vmatpush1.bf16.msra.mxu0 %v236
  %1474 = vmatprep.subr.bf16.mxu0 0
  %1475 = vmatpush2.bf16.msra.mxu0 0
  %1476 = vmatprep.subr.bf16.mxu0 0
  %1477 = vmatpush2.bf16.msra.mxu0 0
  %1478 = vmatprep.subr.bf16.mxu0 0
  %1479 = vmatpush2.bf16.msra.mxu0 0
  %1480 = vmatprep.subr.bf16.mxu0 0
  %1481 = vmatpush2.bf16.msra.mxu0 0
  %1482 = vmatprep.subr.bf16.mxu0 0
  %1483 = vmatpush2.bf16.msra.mxu0 0
  %1484 = vmatprep.subr.bf16.mxu0 0
  %1485 = vmatpush2.bf16.msra.mxu0 0
  %1486 = vmatprep.subr.bf16.mxu0 0
  %1487 = vmatpush2.bf16.msra.mxu0 0
  %1488 = vmatprep.subr.bf16.mxu0 0
  %1489 = vmatpush2.bf16.msra.mxu0 0
  %1490 = vmatprep.mubr.bf16.mxu0 0
  %1491 = vmatmul.mubr.bf16.gmra.mxu0 %v1375
  %v1492 = vpop.f32.mrf.mxu0
  %v1493 = vadd.f32 0.0, %v1492
  %v1494 = vpop.f32.mrf.mxu0
  %v1495 = vpop.f32.mrf.mxu0
  %v1496 = vpop.f32.mrf.mxu0
  %1497 = vdwg.mxu0
  %v1498 = vadd.f32 %v1372, %v1411
  %v1499 = vtanh.pop %v1498
  %v1500 = vadd.f32 %v1373, %v1413
  %v1501 = vtanh.pop %v1500
  %v1502 = vadd.f32 %v1374, %v1452
  %v1503 = vtanh.pop %v1502
  %v1504 = vsub.f32 1.0, %v1499
  %v1505 = vmul.f32 %v1499, %v1504
  %v1506 = vsub.f32 1.0, %v1501
  %v1507 = vmul.f32 %v1501, %v1506
  %v1508 = vsub.f32 1.0, %v1503
  %v1509 = vmul.f32 %v1503, %v1508
  %v1510 = vmul.f32 %v1507, %v1509
  %v1511 = vmul.f32 %v1505, %v1510
  %v1512 = vpack.c.bf16 %v1511, %v1511
  %1513 = vmatprep.subr.bf16.mxu0 %v512
  %1514 = vmatpush1.bf16.msra.mxu0 %v511
  %1515 = vmatprep.subr.bf16.mxu0 %v510
  %1516 = vmatpush1.bf16.msra.mxu0 %v509
  %1517 = vmatprep.subr.bf16.mxu0 %v508
  %1518 = vmatpush1.bf16.msra.mxu0 %v507
  %1519 = vmatprep.subr.bf16.mxu0 %v506
  %1520 = vmatpush1.bf16.msra.mxu0 %v505
  %1521 = vmatprep.subr.bf16.mxu0 %v504
  %1522 = vmatpush1.bf16.msra.mxu0 %v503
  %1523 = vmatprep.subr.bf16.mxu0 %v502
  %1524 = vmatpush1.bf16.msra.mxu0 %v501
  %1525 = vmatprep.subr.bf16.mxu0 %v500
  %1526 = vmatpush1.bf16.msra.mxu0 %v499
  %1527 = vmatprep.subr.bf16.mxu0 %v498
  %1528 = vmatpush1.bf16.msra.mxu0 %v497
  %1529 = vmatprep.subr.bf16.mxu0 0
  %1530 = vmatpush2.bf16.msra.mxu0 0
  %1531 = vmatprep.subr.bf16.mxu0 0
  %1532 = vmatpush2.bf16.msra.mxu0 0
  %1533 = vmatprep.subr.bf16.mxu0 0
  %1534 = vmatpush2.bf16.msra.mxu0 0
  %1535 = vmatprep.subr.bf16.mxu0 0
  %1536 = vmatpush2.bf16.msra.mxu0 0
  %1537 = vmatprep.subr.bf16.mxu0 0
  %1538 = vmatpush2.bf16.msra.mxu0 0
  %1539 = vmatprep.subr.bf16.mxu0 0
  %1540 = vmatpush2.bf16.msra.mxu0 0
  %1541 = vmatprep.subr.bf16.mxu0 0
  %1542 = vmatpush2.bf16.msra.mxu0 0
  %1543 = vmatprep.subr.bf16.mxu0 0
  %1544 = vmatpush2.bf16.msra.mxu0 0
  %1545 = vmatprep.mubr.bf16.mxu0 0
  %1546 = vmatmul.mubr.bf16.gmra.mxu0 %v1512
  %v1547 = vpop.f32.mrf.mxu0
  %v1548 = vadd.f32 %v92, %v1547
  %v1549 = vpop.f32.mrf.mxu0
  %v1550 = vadd.f32 %v96, %v1549
  %v1551 = vpop.f32.mrf.mxu0
  %v1552 = vpop.f32.mrf.mxu0
  %1553 = vdwg.mxu0
  %v1554 = vadd.f32 %v1548, %v1454
  %v1555 = vxor.u32 %v1554, 2147483648
  %v1556 = vmul.f32 %v1555, 1.442695
  %v1557 = vpow.pop %v1556
  %v1558 = vadd.f32 %v1557, 1.0
  %v1559 = vrcp.pop %v1558
  %v1560 = vmul.f32 1.0, %v1559
  %v1561 = vadd.f32 %v1550, %v1493
  %v1562 = vtanh.pop %v1561
  %v1563 = vsub.f32 %v1368, %v1562
  %v1564 = vmul.f32 %v1560, %v1563
  %v1565 = vadd.f32 %v1562, %v1564
  %s1566 = scalar_lea.vmem %s4, 40
  %1567 = vst [vmem:[%s1566] sm:$0xff] %v1565
  %s1568 = scalar_lea.vmem %s0, 144
  %v1569 = vld [vmem:[%s1568] sm:$0xff]
  %v1570 = vld [vmem:[%s1568 + $0x8] sm:$0xff]
  %v1571 = vld [vmem:[%s1568 + $0x10] sm:$0xff]
  %v1572 = vpack.c.bf16 %v1565, %v1565
  %1573 = vmatprep.subr.bf16.mxu0 %v268
  %1574 = vmatpush1.bf16.msra.mxu0 %v267
  %1575 = vmatprep.subr.bf16.mxu0 %v263
  %1576 = vmatpush1.bf16.msra.mxu0 %v262
  %1577 = vmatprep.subr.bf16.mxu0 %v258
  %1578 = vmatpush1.bf16.msra.mxu0 %v257
  %1579 = vmatprep.subr.bf16.mxu0 %v253
  %1580 = vmatpush1.bf16.msra.mxu0 %v252
  %1581 = vmatprep.subr.bf16.mxu0 %v248
  %1582 = vmatpush1.bf16.msra.mxu0 %v247
  %1583 = vmatprep.subr.bf16.mxu0 %v243
  %1584 = vmatpush1.bf16.msra.mxu0 %v242
  %1585 = vmatprep.subr.bf16.mxu0 %v238
  %1586 = vmatpush1.bf16.msra.mxu0 %v237
  %1587 = vmatprep.subr.bf16.mxu0 %v233
  %1588 = vmatpush1.bf16.msra.mxu0 %v232
  %1589 = vmatprep.subr.bf16.mxu0 0
  %1590 = vmatpush2.bf16.msra.mxu0 0
  %1591 = vmatprep.subr.bf16.mxu0 0
  %1592 = vmatpush2.bf16.msra.mxu0 0
  %1593 = vmatprep.subr.bf16.mxu0 0
  %1594 = vmatpush2.bf16.msra.mxu0 0
  %1595 = vmatprep.subr.bf16.mxu0 0
  %1596 = vmatpush2.bf16.msra.mxu0 0
  %1597 = vmatprep.subr.bf16.mxu0 0
  %1598 = vmatpush2.bf16.msra.mxu0 0
  %1599 = vmatprep.subr.bf16.mxu0 0
  %1600 = vmatpush2.bf16.msra.mxu0 0
  %1601 = vmatprep.subr.bf16.mxu0 0
  %1602 = vmatpush2.bf16.msra.mxu0 0
  %1603 = vmatprep.subr.bf16.mxu0 0
  %1604 = vmatpush2.bf16.msra.mxu0 0
  %1605 = vmatprep.mubr.bf16.mxu0 0
  %1606 = vmatmul.mubr.bf16.gmra.mxu0 %v1572
  %v1607 = vpop.f32.mrf.mxu0
  %v1608 = vadd.f32 0.0, %v1607
  %v1609 = vpop.f32.mrf.mxu0
  %v1610 = vadd.f32 0.0, %v1609
  %v1611 = vpop.f32.mrf.mxu0
  %v1612 = vpop.f32.mrf.mxu0
  %1613 = vdwg.mxu0
  %1614 = vmatprep.subr.bf16.mxu0 %v270
  %1615 = vmatpush1.bf16.msra.mxu0 %v269
  %1616 = vmatprep.subr.bf16.mxu0 %v265
  %1617 = vmatpush1.bf16.msra.mxu0 %v264
  %1618 = vmatprep.subr.bf16.mxu0 %v260
  %1619 = vmatpush1.bf16.msra.mxu0 %v259
  %1620 = vmatprep.subr.bf16.mxu0 %v255
  %1621 = vmatpush1.bf16.msra.mxu0 %v254
  %1622 = vmatprep.subr.bf16.mxu0 %v250
  %1623 = vmatpush1.bf16.msra.mxu0 %v249
  %1624 = vmatprep.subr.bf16.mxu0 %v245
  %1625 = vmatpush1.bf16.msra.mxu0 %v244
  %1626 = vmatprep.subr.bf16.mxu0 %v240
  %1627 = vmatpush1.bf16.msra.mxu0 %v239
  %1628 = vmatprep.subr.bf16.mxu0 %v235
  %1629 = vmatpush1.bf16.msra.mxu0 %v234
  %1630 = vmatprep.subr.bf16.mxu0 0
  %1631 = vmatpush2.bf16.msra.mxu0 0
  %1632 = vmatprep.subr.bf16.mxu0 0
  %1633 = vmatpush2.bf16.msra.mxu0 0
  %1634 = vmatprep.subr.bf16.mxu0 0
  %1635 = vmatpush2.bf16.msra.mxu0 0
  %1636 = vmatprep.subr.bf16.mxu0 0
  %1637 = vmatpush2.bf16.msra.mxu0 0
  %1638 = vmatprep.subr.bf16.mxu0 0
  %1639 = vmatpush2.bf16.msra.mxu0 0
  %1640 = vmatprep.subr.bf16.mxu0 0
  %1641 = vmatpush2.bf16.msra.mxu0 0
  %1642 = vmatprep.subr.bf16.mxu0 0
  %1643 = vmatpush2.bf16.msra.mxu0 0
  %1644 = vmatprep.subr.bf16.mxu0 0
  %1645 = vmatpush2.bf16.msra.mxu0 0
  %1646 = vmatprep.mubr.bf16.mxu0 0
  %1647 = vmatmul.mubr.bf16.gmra.mxu0 %v1572
  %v1648 = vpop.f32.mrf.mxu0
  %v1649 = vadd.f32 0.0, %v1648
  %v1650 = vpop.f32.mrf.mxu0
  %v1651 = vadd.f32 0.0, %v1650
  %v1652 = vpop.f32.mrf.mxu0
  %v1653 = vpop.f32.mrf.mxu0
  %1654 = vdwg.mxu0
  %1655 = vmatprep.subr.bf16.mxu0 0
  %1656 = vmatpush1.bf16.msra.mxu0 %v271
  %1657 = vmatprep.subr.bf16.mxu0 0
  %1658 = vmatpush1.bf16.msra.mxu0 %v266
  %1659 = vmatprep.subr.bf16.mxu0 0
  %1660 = vmatpush1.bf16.msra.mxu0 %v261
  %1661 = vmatprep.subr.bf16.mxu0 0
  %1662 = vmatpush1.bf16.msra.mxu0 %v256
  %1663 = vmatprep.subr.bf16.mxu0 0
  %1664 = vmatpush1.bf16.msra.mxu0 %v251
  %1665 = vmatprep.subr.bf16.mxu0 0
  %1666 = vmatpush1.bf16.msra.mxu0 %v246
  %1667 = vmatprep.subr.bf16.mxu0 0
  %1668 = vmatpush1.bf16.msra.mxu0 %v241
  %1669 = vmatprep.subr.bf16.mxu0 0
  %1670 = vmatpush1.bf16.msra.mxu0 %v236
  %1671 = vmatprep.subr.bf16.mxu0 0
  %1672 = vmatpush2.bf16.msra.mxu0 0
  %1673 = vmatprep.subr.bf16.mxu0 0
  %1674 = vmatpush2.bf16.msra.mxu0 0
  %1675 = vmatprep.subr.bf16.mxu0 0
  %1676 = vmatpush2.bf16.msra.mxu0 0
  %1677 = vmatprep.subr.bf16.mxu0 0
  %1678 = vmatpush2.bf16.msra.mxu0 0
  %1679 = vmatprep.subr.bf16.mxu0 0
  %1680 = vmatpush2.bf16.msra.mxu0 0
  %1681 = vmatprep.subr.bf16.mxu0 0
  %1682 = vmatpush2.bf16.msra.mxu0 0
  %1683 = vmatprep.subr.bf16.mxu0 0
  %1684 = vmatpush2.bf16.msra.mxu0 0
  %1685 = vmatprep.subr.bf16.mxu0 0
  %1686 = vmatpush2.bf16.msra.mxu0 0
  %1687 = vmatprep.mubr.bf16.mxu0 0
  %1688 = vmatmul.mubr.bf16.gmra.mxu0 %v1572
  %v1689 = vpop.f32.mrf.mxu0
  %v1690 = vadd.f32 0.0, %v1689
  %v1691 = vpop.f32.mrf.mxu0
  %v1692 = vpop.f32.mrf.mxu0
  %v1693 = vpop.f32.mrf.mxu0
  %1694 = vdwg.mxu0
  %v1695 = vadd.f32 %v1569, %v1608
  %v1696 = vtanh.pop %v1695
  %v1697 = vadd.f32 %v1570, %v1610
  %v1698 = vtanh.pop %v1697
  %v1699 = vadd.f32 %v1571, %v1649
  %v1700 = vtanh.pop %v1699
  %v1701 = vsub.f32 1.0, %v1696
  %v1702 = vmul.f32 %v1696, %v1701
  %v1703 = vsub.f32 1.0, %v1698
  %v1704 = vmul.f32 %v1698, %v1703
  %v1705 = vsub.f32 1.0, %v1700
  %v1706 = vmul.f32 %v1700, %v1705
  %v1707 = vmul.f32 %v1704, %v1706
  %v1708 = vmul.f32 %v1702, %v1707
  %v1709 = vpack.c.bf16 %v1708, %v1708
  %1710 = vmatprep.subr.bf16.mxu0 %v512
  %1711 = vmatpush1.bf16.msra.mxu0 %v511
  %1712 = vmatprep.subr.bf16.mxu0 %v510
  %1713 = vmatpush1.bf16.msra.mxu0 %v509
  %1714 = vmatprep.subr.bf16.mxu0 %v508
  %1715 = vmatpush1.bf16.msra.mxu0 %v507
  %1716 = vmatprep.subr.bf16.mxu0 %v506
  %1717 = vmatpush1.bf16.msra.mxu0 %v505
  %1718 = vmatprep.subr.bf16.mxu0 %v504
  %1719 = vmatpush1.bf16.msra.mxu0 %v503
  %1720 = vmatprep.subr.bf16.mxu0 %v502
  %1721 = vmatpush1.bf16.msra.mxu0 %v501
  %1722 = vmatprep.subr.bf16.mxu0 %v500
  %1723 = vmatpush1.bf16.msra.mxu0 %v499
  %1724 = vmatprep.subr.bf16.mxu0 %v498
  %1725 = vmatpush1.bf16.msra.mxu0 %v497
  %1726 = vmatprep.subr.bf16.mxu0 0
  %1727 = vmatpush2.bf16.msra.mxu0 0
  %1728 = vmatprep.subr.bf16.mxu0 0
  %1729 = vmatpush2.bf16.msra.mxu0 0
  %1730 = vmatprep.subr.bf16.mxu0 0
  %1731 = vmatpush2.bf16.msra.mxu0 0
  %1732 = vmatprep.subr.bf16.mxu0 0
  %1733 = vmatpush2.bf16.msra.mxu0 0
  %1734 = vmatprep.subr.bf16.mxu0 0
  %1735 = vmatpush2.bf16.msra.mxu0 0
  %1736 = vmatprep.subr.bf16.mxu0 0
  %1737 = vmatpush2.bf16.msra.mxu0 0
  %1738 = vmatprep.subr.bf16.mxu0 0
  %1739 = vmatpush2.bf16.msra.mxu0 0
  %1740 = vmatprep.subr.bf16.mxu0 0
  %1741 = vmatpush2.bf16.msra.mxu0 0
  %1742 = vmatprep.mubr.bf16.mxu0 0
  %1743 = vmatmul.mubr.bf16.gmra.mxu0 %v1709
  %v1744 = vpop.f32.mrf.mxu0
  %v1745 = vadd.f32 %v92, %v1744
  %v1746 = vpop.f32.mrf.mxu0
  %v1747 = vadd.f32 %v96, %v1746
  %v1748 = vpop.f32.mrf.mxu0
  %v1749 = vpop.f32.mrf.mxu0
  %1750 = vdwg.mxu0
  %v1751 = vadd.f32 %v1745, %v1651
  %v1752 = vxor.u32 %v1751, 2147483648
  %v1753 = vmul.f32 %v1752, 1.442695
  %v1754 = vpow.pop %v1753
  %v1755 = vadd.f32 %v1754, 1.0
  %v1756 = vrcp.pop %v1755
  %v1757 = vmul.f32 1.0, %v1756
  %v1758 = vadd.f32 %v1747, %v1690
  %v1759 = vtanh.pop %v1758
  %v1760 = vsub.f32 %v1565, %v1759
  %v1761 = vmul.f32 %v1757, %v1760
  %v1762 = vadd.f32 %v1759, %v1761
  %s1763 = scalar_lea.vmem %s4, 48
  %1764 = vst [vmem:[%s1763] sm:$0xff] %v1762
  %s1765 = scalar_lea.vmem %s0, 168
  %v1766 = vld [vmem:[%s1765] sm:$0xff]
  %v1767 = vld [vmem:[%s1765 + $0x8] sm:$0xff]
  %v1768 = vld [vmem:[%s1765 + $0x10] sm:$0xff]
  %v1769 = vpack.c.bf16 %v1762, %v1762
  %1770 = vmatprep.subr.bf16.mxu0 %v268
  %1771 = vmatpush1.bf16.msra.mxu0 %v267
  %1772 = vmatprep.subr.bf16.mxu0 %v263
  %1773 = vmatpush1.bf16.msra.mxu0 %v262
  %1774 = vmatprep.subr.bf16.mxu0 %v258
  %1775 = vmatpush1.bf16.msra.mxu0 %v257
  %1776 = vmatprep.subr.bf16.mxu0 %v253
  %1777 = vmatpush1.bf16.msra.mxu0 %v252
  %1778 = vmatprep.subr.bf16.mxu0 %v248
  %1779 = vmatpush1.bf16.msra.mxu0 %v247
  %1780 = vmatprep.subr.bf16.mxu0 %v243
  %1781 = vmatpush1.bf16.msra.mxu0 %v242
  %1782 = vmatprep.subr.bf16.mxu0 %v238
  %1783 = vmatpush1.bf16.msra.mxu0 %v237
  %1784 = vmatprep.subr.bf16.mxu0 %v233
  %1785 = vmatpush1.bf16.msra.mxu0 %v232
  %1786 = vmatprep.subr.bf16.mxu0 0
  %1787 = vmatpush2.bf16.msra.mxu0 0
  %1788 = vmatprep.subr.bf16.mxu0 0
  %1789 = vmatpush2.bf16.msra.mxu0 0
  %1790 = vmatprep.subr.bf16.mxu0 0
  %1791 = vmatpush2.bf16.msra.mxu0 0
  %1792 = vmatprep.subr.bf16.mxu0 0
  %1793 = vmatpush2.bf16.msra.mxu0 0
  %1794 = vmatprep.subr.bf16.mxu0 0
  %1795 = vmatpush2.bf16.msra.mxu0 0
  %1796 = vmatprep.subr.bf16.mxu0 0
  %1797 = vmatpush2.bf16.msra.mxu0 0
  %1798 = vmatprep.subr.bf16.mxu0 0
  %1799 = vmatpush2.bf16.msra.mxu0 0
  %1800 = vmatprep.subr.bf16.mxu0 0
  %1801 = vmatpush2.bf16.msra.mxu0 0
  %1802 = vmatprep.mubr.bf16.mxu0 0
  %1803 = vmatmul.mubr.bf16.gmra.mxu0 %v1769
  %v1804 = vpop.f32.mrf.mxu0
  %v1805 = vadd.f32 0.0, %v1804
  %v1806 = vpop.f32.mrf.mxu0
  %v1807 = vadd.f32 0.0, %v1806
  %v1808 = vpop.f32.mrf.mxu0
  %v1809 = vpop.f32.mrf.mxu0
  %1810 = vdwg.mxu0
  %1811 = vmatprep.subr.bf16.mxu0 %v270
  %1812 = vmatpush1.bf16.msra.mxu0 %v269
  %1813 = vmatprep.subr.bf16.mxu0 %v265
  %1814 = vmatpush1.bf16.msra.mxu0 %v264
  %1815 = vmatprep.subr.bf16.mxu0 %v260
  %1816 = vmatpush1.bf16.msra.mxu0 %v259
  %1817 = vmatprep.subr.bf16.mxu0 %v255
  %1818 = vmatpush1.bf16.msra.mxu0 %v254
  %1819 = vmatprep.subr.bf16.mxu0 %v250
  %1820 = vmatpush1.bf16.msra.mxu0 %v249
  %1821 = vmatprep.subr.bf16.mxu0 %v245
  %1822 = vmatpush1.bf16.msra.mxu0 %v244
  %1823 = vmatprep.subr.bf16.mxu0 %v240
  %1824 = vmatpush1.bf16.msra.mxu0 %v239
  %1825 = vmatprep.subr.bf16.mxu0 %v235
  %1826 = vmatpush1.bf16.msra.mxu0 %v234
  %1827 = vmatprep.subr.bf16.mxu0 0
  %1828 = vmatpush2.bf16.msra.mxu0 0
  %1829 = vmatprep.subr.bf16.mxu0 0
  %1830 = vmatpush2.bf16.msra.mxu0 0
  %1831 = vmatprep.subr.bf16.mxu0 0
  %1832 = vmatpush2.bf16.msra.mxu0 0
  %1833 = vmatprep.subr.bf16.mxu0 0
  %1834 = vmatpush2.bf16.msra.mxu0 0
  %1835 = vmatprep.subr.bf16.mxu0 0
  %1836 = vmatpush2.bf16.msra.mxu0 0
  %1837 = vmatprep.subr.bf16.mxu0 0
  %1838 = vmatpush2.bf16.msra.mxu0 0
  %1839 = vmatprep.subr.bf16.mxu0 0
  %1840 = vmatpush2.bf16.msra.mxu0 0
  %1841 = vmatprep.subr.bf16.mxu0 0
  %1842 = vmatpush2.bf16.msra.mxu0 0
  %1843 = vmatprep.mubr.bf16.mxu0 0
  %1844 = vmatmul.mubr.bf16.gmra.mxu0 %v1769
  %v1845 = vpop.f32.mrf.mxu0
  %v1846 = vadd.f32 0.0, %v1845
  %v1847 = vpop.f32.mrf.mxu0
  %v1848 = vadd.f32 0.0, %v1847
  %v1849 = vpop.f32.mrf.mxu0
  %v1850 = vpop.f32.mrf.mxu0
  %1851 = vdwg.mxu0
  %1852 = vmatprep.subr.bf16.mxu0 0
  %1853 = vmatpush1.bf16.msra.mxu0 %v271
  %1854 = vmatprep.subr.bf16.mxu0 0
  %1855 = vmatpush1.bf16.msra.mxu0 %v266
  %1856 = vmatprep.subr.bf16.mxu0 0
  %1857 = vmatpush1.bf16.msra.mxu0 %v261
  %1858 = vmatprep.subr.bf16.mxu0 0
  %1859 = vmatpush1.bf16.msra.mxu0 %v256
  %1860 = vmatprep.subr.bf16.mxu0 0
  %1861 = vmatpush1.bf16.msra.mxu0 %v251
  %1862 = vmatprep.subr.bf16.mxu0 0
  %1863 = vmatpush1.bf16.msra.mxu0 %v246
  %1864 = vmatprep.subr.bf16.mxu0 0
  %1865 = vmatpush1.bf16.msra.mxu0 %v241
  %1866 = vmatprep.subr.bf16.mxu0 0
  %1867 = vmatpush1.bf16.msra.mxu0 %v236
  %1868 = vmatprep.subr.bf16.mxu0 0
  %1869 = vmatpush2.bf16.msra.mxu0 0
  %1870 = vmatprep.subr.bf16.mxu0 0
  %1871 = vmatpush2.bf16.msra.mxu0 0
  %1872 = vmatprep.subr.bf16.mxu0 0
  %1873 = vmatpush2.bf16.msra.mxu0 0
  %1874 = vmatprep.subr.bf16.mxu0 0
  %1875 = vmatpush2.bf16.msra.mxu0 0
  %1876 = vmatprep.subr.bf16.mxu0 0
  %1877 = vmatpush2.bf16.msra.mxu0 0
  %1878 = vmatprep.subr.bf16.mxu0 0
  %1879 = vmatpush2.bf16.msra.mxu0 0
  %1880 = vmatprep.subr.bf16.mxu0 0
  %1881 = vmatpush2.bf16.msra.mxu0 0
  %1882 = vmatprep.subr.bf16.mxu0 0
  %1883 = vmatpush2.bf16.msra.mxu0 0
  %1884 = vmatprep.mubr.bf16.mxu0 0
  %1885 = vmatmul.mubr.bf16.gmra.mxu0 %v1769
  %v1886 = vpop.f32.mrf.mxu0
  %v1887 = vadd.f32 0.0, %v1886
  %v1888 = vpop.f32.mrf.mxu0
  %v1889 = vpop.f32.mrf.mxu0
  %v1890 = vpop.f32.mrf.mxu0
  %1891 = vdwg.mxu0
  %v1892 = vadd.f32 %v1766, %v1805
  %v1893 = vtanh.pop %v1892
  %v1894 = vadd.f32 %v1767, %v1807
  %v1895 = vtanh.pop %v1894
  %v1896 = vadd.f32 %v1768, %v1846
  %v1897 = vtanh.pop %v1896
  %v1898 = vsub.f32 1.0, %v1893
  %v1899 = vmul.f32 %v1893, %v1898
  %v1900 = vsub.f32 1.0, %v1895
  %v1901 = vmul.f32 %v1895, %v1900
  %v1902 = vsub.f32 1.0, %v1897
  %v1903 = vmul.f32 %v1897, %v1902
  %v1904 = vmul.f32 %v1901, %v1903
  %v1905 = vmul.f32 %v1899, %v1904
  %v1906 = vpack.c.bf16 %v1905, %v1905
  %1907 = vmatprep.subr.bf16.mxu0 %v512
  %1908 = vmatpush1.bf16.msra.mxu0 %v511
  %1909 = vmatprep.subr.bf16.mxu0 %v510
  %1910 = vmatpush1.bf16.msra.mxu0 %v509
  %1911 = vmatprep.subr.bf16.mxu0 %v508
  %1912 = vmatpush1.bf16.msra.mxu0 %v507
  %1913 = vmatprep.subr.bf16.mxu0 %v506
  %1914 = vmatpush1.bf16.msra.mxu0 %v505
  %1915 = vmatprep.subr.bf16.mxu0 %v504
  %1916 = vmatpush1.bf16.msra.mxu0 %v503
  %1917 = vmatprep.subr.bf16.mxu0 %v502
  %1918 = vmatpush1.bf16.msra.mxu0 %v501
  %1919 = vmatprep.subr.bf16.mxu0 %v500
  %1920 = vmatpush1.bf16.msra.mxu0 %v499
  %1921 = vmatprep.subr.bf16.mxu0 %v498
  %1922 = vmatpush1.bf16.msra.mxu0 %v497
  %1923 = vmatprep.subr.bf16.mxu0 0
  %1924 = vmatpush2.bf16.msra.mxu0 0
  %1925 = vmatprep.subr.bf16.mxu0 0
  %1926 = vmatpush2.bf16.msra.mxu0 0
  %1927 = vmatprep.subr.bf16.mxu0 0
  %1928 = vmatpush2.bf16.msra.mxu0 0
  %1929 = vmatprep.subr.bf16.mxu0 0
  %1930 = vmatpush2.bf16.msra.mxu0 0
  %1931 = vmatprep.subr.bf16.mxu0 0
  %1932 = vmatpush2.bf16.msra.mxu0 0
  %1933 = vmatprep.subr.bf16.mxu0 0
  %1934 = vmatpush2.bf16.msra.mxu0 0
  %1935 = vmatprep.subr.bf16.mxu0 0
  %1936 = vmatpush2.bf16.msra.mxu0 0
  %1937 = vmatprep.subr.bf16.mxu0 0
  %1938 = vmatpush2.bf16.msra.mxu0 0
  %1939 = vmatprep.mubr.bf16.mxu0 0
  %1940 = vmatmul.mubr.bf16.gmra.mxu0 %v1906
  %v1941 = vpop.f32.mrf.mxu0
  %v1942 = vadd.f32 %v92, %v1941
  %v1943 = vpop.f32.mrf.mxu0
  %v1944 = vadd.f32 %v96, %v1943
  %v1945 = vpop.f32.mrf.mxu0
  %v1946 = vpop.f32.mrf.mxu0
  %1947 = vdwg.mxu0
  %v1948 = vadd.f32 %v1942, %v1848
  %v1949 = vxor.u32 %v1948, 2147483648
  %v1950 = vmul.f32 %v1949, 1.442695
  %v1951 = vpow.pop %v1950
  %v1952 = vadd.f32 %v1951, 1.0
  %v1953 = vrcp.pop %v1952
  %v1954 = vmul.f32 1.0, %v1953
  %v1955 = vadd.f32 %v1944, %v1887
  %v1956 = vtanh.pop %v1955
  %v1957 = vsub.f32 %v1762, %v1956
  %v1958 = vmul.f32 %v1954, %v1957
  %v1959 = vadd.f32 %v1956, %v1958
  %s1960 = scalar_lea.vmem %s4, 56
  %1961 = vst [vmem:[%s1960] sm:$0xff] %v1959
  %1962 = vst [vmem:[#allocation2] sm:$0xff] %v1959
  // Predicated region
  $region22: #{net_forward.1} parent=0 // pred_check
    _
  $region23: #{net_forward.1} parent=0 // pred_check_branch
    %1964 = sbr.rel (0) target = $region25
  $region24: #{net_forward.1} parent=0 // pred_region
    _
  $region25: #{net_forward.1} parent=0 // pred_fallthru
    _
  // Predicated region
  $region26: #{net_forward.1} parent=0 // pred_check
    _
  $region27: #{net_forward.1} parent=0 // pred_check_branch
    %1966 = sbr.rel (0) target = $region29
  $region28: #{net_forward.1} parent=0 // pred_region
    _
  $region29: #{net_forward.1} parent=0 // pred_fallthru
    _

</llo_original>
